<compile_context>
chip_gen: v7x
topology: tpu7x:2x2x1
jax: 0.10.0
libtpu: 0.0.40
codegen_flags: <defaults>
</compile_context>

<pallas_src>
import functools

import numpy as np
import jax
import jax.numpy as jnp
from jax.experimental import pallas as pl
from jax.experimental.pallas import tpu as pltpu

LANE = 128


def _round_up(x, m):
    return ((x + m - 1) // m) * m


def _padded_rows(m):
    return _round_up(m, 8) if m <= 1024 else _round_up(m, 512)


def _pick_tm(mp):
    """Largest multiple-of-8 divisor of mp that is <= min(256, mp//2): bounds VMEM and
    gives >=2 'parallel' grid steps (v7x megacore) whenever mp allows it."""
    assert mp % 8 == 0
    target = max(8, min(256, (mp // 2) // 8 * 8))
    best, t = 8, 8
    while t <= target:
        if mp % t == 0:
            best = t
        t += 8
    return best


def _pick_seq_tile(sp, cap):
    t = max(128, (min(cap, sp) // 128) * 128)
    while sp % t:
        t -= 128
    return max(t, 128)


def _pad_cols(x, cols):
    x = x.astype(jnp.float32)
    return jnp.pad(x, ((0, 0), (0, cols - x.shape[1])))


def _pad_rows(x, rows):
    return jnp.pad(x, ((0, rows - x.shape[0]),) + ((0, 0),) * (x.ndim - 1))


def _vmem_limit(est_bytes):
    return int(min(64 * 1024 * 1024, max(16 * 1024 * 1024, 2 * est_bytes + (4 << 20))))


# --------------------------------------------------------------------------
# In-kernel helpers
# --------------------------------------------------------------------------
def _masked_layernorm(x, g, b, d_real, eps):
    """LayerNorm over the first d_real channels; pad channels of x are zero."""
    inv_d = 1.0 / float(d_real)
    s1 = jnp.sum(x, axis=-1, keepdims=True)
    s2 = jnp.sum(x * x, axis=-1, keepdims=True)
    mean = s1 * inv_d
    var = s2 * inv_d - mean * mean
    xn = (x - mean) * jax.lax.rsqrt(var + eps)
    return xn * g + b        # gamma/beta are zero-padded -> pad channels stay 0


# --------------------------------------------------------------------------
# Pallas kernels
# --------------------------------------------------------------------------
def _ln_qkv_kernel(x_ref, pos_ref, g_ref, b_ref, w_ref, q_ref, kv_ref,
                   *, d_real, d_pad, eps):
    """[q | k|v] = [LN(x) | pos] @ W   (single K=2*Dp matmul, two bf16 outputs)."""
    x = x_ref[...]
    xn = _masked_layernorm(x, g_ref[...], b_ref[...], d_real, eps)
    z = jnp.concatenate([xn, pos_ref[...]], axis=-1).astype(jnp.bfloat16)
    y = jnp.dot(z, w_ref[...], preferred_element_type=jnp.float32)
    q_ref[...] = y[:, :d_pad].astype(q_ref.dtype)
    kv_ref[...] = y[:, d_pad:].astype(kv_ref.dtype)


def _ln_dualproj_kernel(x_ref, pos_ref, g_ref, b_ref, w_ref, bias_ref, o_ref,
                        *, d_real, eps):
    """y = [LN(x) | pos] @ W + bias   (fused LN + stacked dual projection)."""
    x = x_ref[...]
    xn = _masked_layernorm(x, g_ref[...], b_ref[...], d_real, eps)
    z = jnp.concatenate([xn, pos_ref[...]], axis=-1).astype(jnp.bfloat16)
    y = jnp.dot(z, w_ref[...], preferred_element_type=jnp.float32) + bias_ref[...]
    o_ref[...] = y.astype(o_ref.dtype)


def _ffn_kernel(x_ref, g_ref, b_ref, w1_ref, b1_ref, w2_ref, b2_ref, o_ref,
                *, d_real, eps):
    """y = x + W2 @ GELU(W1 @ LN(x))   (whole FFN block in one kernel)."""
    x = x_ref[...]
    xn = _masked_layernorm(x, g_ref[...], b_ref[...], d_real, eps)
    h = jnp.dot(xn.astype(jnp.bfloat16), w1_ref[...],
                preferred_element_type=jnp.float32) + b1_ref[...]
    # TODO(synk): PyTorch nn.GELU default is exact erf-GELU; tanh approximation used here.
    h = jax.nn.gelu(h, approximate=True)
    y = jnp.dot(h.astype(jnp.bfloat16), w2_ref[...],
                preferred_element_type=jnp.float32) + b2_ref[...]
    o_ref[...] = (x + y).astype(o_ref.dtype)


def _proj_res_kernel(x_ref, res_ref, w_ref, b_ref, o_ref):
    """y = res + x @ W + b   (output projection fused with the residual add)."""
    y = jnp.dot(x_ref[...].astype(jnp.bfloat16), w_ref[...],
                preferred_element_type=jnp.float32) + b_ref[...]
    o_ref[...] = (res_ref[...] + y).astype(o_ref.dtype)


def _linear_kernel(x_ref, w_ref, b_ref, o_ref):
    y = jnp.dot(x_ref[...].astype(jnp.bfloat16), w_ref[...],
                preferred_element_type=jnp.float32) + b_ref[...]
    o_ref[...] = y.astype(o_ref.dtype)


def _flash_attn_kernel(q_ref, kv_ref, bias_ref, o_ref, m_ref, l_ref, acc_ref,
                       *, n_heads, head_dim, d_real, d_pad):
    """Online-softmax MHA.  q: (1,tq,Dp) bf16, kv: (1,tk,2*Dp) bf16 (K at lane 0, V at Dp).

    Scratch is lane-dense: m/l are (tq, H) (heads on lanes), acc is (tq, Dp).
    bias is the additive key-padding mask (-1e30 on pads); 1/sqrt(Dh) is folded into wq.
    """
    j = pl.program_id(2)
    n_kv = pl.num_programs(2)

    @pl.when(j == 0)
    def _init():
        m_ref[...] = jnp.full(m_ref.shape, -1e30, jnp.float32)
        l_ref[...] = jnp.zeros(l_ref.shape, jnp.float32)
        acc_ref[...] = jnp.zeros(acc_ref.shape, jnp.float32)

    bias = bias_ref[0]                                   # (1, tk)
    m_prev = m_ref[...]                                  # (tq, H)
    l_prev = l_ref[...]
    acc_prev = acc_ref[...]                              # (tq, Dp)
    dn = (((1,), (1,)), ((), ()))                        # contract last dim of both

    m_parts, l_parts, acc_parts = [], [], []
    for h in range(n_heads):
        lo, hi = h * head_dim, (h + 1) * head_dim
        qh = q_ref[0, :, lo:hi]                          # (tq, Dh) bf16
        kh = kv_ref[0, :, lo:hi]                         # (tk, Dh) bf16
        vh = kv_ref[0, :, d_pad + lo:d_pad + hi]         # (tk, Dh) bf16

        s = jax.lax.dot_general(qh, kh, dn, preferred_element_type=jnp.float32)
        s = s + bias                                     # (tq, tk) f32

        mp_h = m_prev[:, h:h + 1]                        # (tq, 1)
        m_new = jnp.maximum(mp_h, jnp.max(s, axis=-1, keepdims=True))
        alpha = jnp.exp(mp_h - m_new)
        p = jnp.exp(s - m_new)
        l_new = alpha * l_prev[:, h:h + 1] + jnp.sum(p, axis=-1, keepdims=True)
        pv = jnp.dot(p.astype(jnp.bfloat16), vh, preferred_element_type=jnp.float32)
        acc_new = alpha * acc_prev[:, lo:hi] + pv

        m_parts.append(m_new)
        l_parts.append(l_new)
        acc_parts.append(acc_new)

    m_ref[...] = jnp.concatenate(m_parts, axis=-1)
    l_ref[...] = jnp.concatenate(l_parts, axis=-1)
    if d_pad > d_real:
        acc_parts.append(jnp.zeros((acc_prev.shape[0], d_pad - d_real), jnp.float32))
    acc_ref[...] = jnp.concatenate(acc_parts, axis=-1)

    @pl.when(j == n_kv - 1)
    def _finalize():
        acc = acc_ref[...]
        l = l_ref[...]
        outs = [acc[:, h * head_dim:(h + 1) * head_dim] / l[:, h:h + 1]
                for h in range(n_heads)]
        if d_pad > d_real:
            outs.append(jnp.zeros((acc.shape[0], d_pad - d_real), jnp.float32))
        o_ref[0] = jnp.concatenate(outs, axis=-1).astype(o_ref.dtype)


# --------------------------------------------------------------------------
# pallas_call wrappers
# --------------------------------------------------------------------------
def _call_rowwise(kernel_fn, tiled, consts, out_cols, out_dtypes):
    """Row-tiled pallas_call: `tiled` inputs share (tm, cols) blocking; `consts` are whole."""
    mp = tiled[0].shape[0]
    tm = _pick_tm(mp)
    multi = isinstance(out_cols, (tuple, list))
    cols_t = tuple(out_cols) if multi else (out_cols,)
    dts_t = tuple(out_dtypes) if multi else (out_dtypes,)

    in_specs = [pl.BlockSpec((tm, a.shape[1]), lambda i: (i, 0)) for a in tiled]
    # TODO(synk): consts could be single-buffered (pl.Buffered(1)) to halve weight VMEM.
    in_specs += [pl.BlockSpec(a.shape, lambda i, nd=a.ndim: (0,) * nd) for a in consts]

    out_shape_t = tuple(jax.ShapeDtypeStruct((mp, c), dt) for c, dt in zip(cols_t, dts_t))
    out_specs_t = tuple(pl.BlockSpec((tm, c), lambda i: (i, 0)) for c in cols_t)

    est = sum(2 * tm * a.shape[1] * a.dtype.itemsize for a in tiled)
    est += sum(2 * a.size * a.dtype.itemsize for a in consts)
    est += sum(tm * c * (2 * np.dtype(dt).itemsize + 4) for c, dt in zip(cols_t, dts_t))

    fn = pl.pallas_call(
        kernel_fn,
        out_shape=out_shape_t if multi else out_shape_t[0],
        grid=(mp // tm,),
        in_specs=in_specs,
        out_specs=out_specs_t if multi else out_specs_t[0],
        compiler_params=pltpu.CompilerParams(
            dimension_semantics=("parallel",),
            vmem_limit_bytes=_vmem_limit(est)),
    )
    return fn(*tiled, *consts)


def flash_self_attention(q, kv, bias, *, n_heads, d_real, d_pad, tq, tk):
    """q: (B,Sp,Dp) bf16; kv: (B,Sp,2*Dp) bf16; bias: (B,1,Sp) f32 additive mask."""
    B, Sp, _ = q.shape
    head_dim = d_real // n_heads
    n_q, n_kv = Sp // tq, Sp // tk
    kernel = functools.partial(_flash_attn_kernel, n_heads=n_heads,
                               head_dim=head_dim, d_real=d_real, d_pad=d_pad)
    est = 2 * (tq * d_pad * 2 + tk * 2 * d_pad * 2 + tk * 4 + tq * d_pad * 2)
    est += (2 * tq * n_heads + tq * d_pad) * 4 + 4 * tq * tk * 4
    return pl.pallas_call(
        kernel,
        out_shape=jax.ShapeDtypeStruct((B, Sp, d_pad), jnp.bfloat16),
        grid=(B, n_q, n_kv),
        in_specs=[
            pl.BlockSpec((1, tq, d_pad), lambda b, i, j: (b, i, 0)),      # Q tile (bf16)
            pl.BlockSpec((1, tk, 2 * d_pad), lambda b, i, j: (b, j, 0)),  # K|V tile (bf16)
            pl.BlockSpec((1, 1, tk), lambda b, i, j: (b, 0, j)),          # additive key mask
        ],
        out_specs=pl.BlockSpec((1, tq, d_pad), lambda b, i, j: (b, i, 0)),
        scratch_shapes=[
            pltpu.VMEM((tq, n_heads), jnp.float32),   # running max (heads on lanes)
            pltpu.VMEM((tq, n_heads), jnp.float32),   # running denom
            pltpu.VMEM((tq, d_pad), jnp.float32),     # running accumulator (lane-dense)
        ],
        compiler_params=pltpu.CompilerParams(
            dimension_semantics=("parallel", "parallel", "arbitrary"),
            vmem_limit_bytes=_vmem_limit(est)),
    )(q, kv, bias)


# --------------------------------------------------------------------------
# Parameter preparation: fuse, fold scale, lane-align, zero-pad, cast to bf16
# --------------------------------------------------------------------------
def prepare_params(raw, d_model, n_heads, dim_ff, n_levels, n_points):
    Dp = _round_up(d_model, LANE)
    Dh = d_model // n_heads
    hlp = n_heads * n_levels * n_points
    Fp = _round_up(dim_ff, LANE)
    Nsp = _round_up(3 * hlp, LANE)

    def padw(w, rows, cols):
        w = jnp.asarray(w, jnp.float32)
        return jnp.pad(w, ((0, rows - w.shape[0]), (0, cols - w.shape[1])))

    def pv(v, n):
        v = jnp.asarray(v, jnp.float32)
        return jnp.pad(v, (0, n - v.shape[0])).reshape(1, n)

    sa = raw["self_attn"]
    scale = 1.0 / float(np.sqrt(Dh))
    wq_s = jnp.asarray(sa["wq"], jnp.float32) * scale     # fold 1/sqrt(Dh) into wq
    blk = lambda w: padw(w, d_model, Dp)                  # lane-align each projection block
    w_x = jnp.concatenate([blk(wq_s), blk(sa["wk"]), blk(sa["wv"])], axis=1)      # -> LN(x)
    w_pos = jnp.concatenate([blk(wq_s), blk(sa["wk"]),
                             jnp.zeros((d_model, Dp), jnp.float32)], axis=1)      # -> pos
    w_qkv = jnp.concatenate([padw(w_x, Dp, 3 * Dp), padw(w_pos, Dp, 3 * Dp)], axis=0)

    ms = raw["msdeform"]
    w_offaw = jnp.concatenate([ms["w_off"], ms["w_aw"]], axis=1)
    b_offaw = jnp.concatenate([ms["b_off"], ms["b_aw"]], axis=0)
    w_offaw_p = padw(w_offaw, Dp, Nsp)
    w_ms = jnp.concatenate([w_offaw_p, w_offaw_p], axis=0)     # offsets/aw use LN(x)+pos

    ff = raw["ffn"]
    return {
        "self_attn": {
            "ln_g": pv(sa["ln_g"], Dp), "ln_b": pv(sa["ln_b"], Dp),
            "w_qkv": w_qkv.astype(jnp.bfloat16),                 # (2Dp, 3Dp)
            "wo": padw(sa["wo"], Dp, Dp).astype(jnp.bfloat16),
            "b_o": jnp.zeros((1, Dp), jnp.float32),              # attn_proj_bias=False
        },
        "msdeform": {
            "ln_g": pv(ms["ln_g"], Dp), "ln_b": pv(ms["ln_b"], Dp),
            "w_offaw": w_ms.astype(jnp.bfloat16), "b_offaw": pv(b_offaw, Nsp),
            "w_v": padw(ms["w_v"], Dp, Dp).astype(jnp.bfloat16), "b_v": pv(ms["b_v"], Dp),
            "w_out": padw(ms["w_out"], Dp, Dp).astype(jnp.bfloat16), "b_out": pv(ms["b_out"], Dp),
        },
        "ffn": {
            "ln_g": pv(ff["ln_g"], Dp), "ln_b": pv(ff["ln_b"], Dp),
            "w1": padw(ff["w1"], Dp, Fp).astype(jnp.bfloat16), "b1": pv(ff["b1"], Fp),
            "w2": padw(ff["w2"], Fp, Dp).astype(jnp.bfloat16), "b2": pv(ff["b2"], Dp),
        },
    }


# --------------------------------------------------------------------------
# Full TransformerEncoderLayer.forward
# --------------------------------------------------------------------------
def transformer_encoder_layer_forward(params, queries, query_pos_encoding,
                                      query_ij_indices, query_normalized_xy_positions,
                                      batch_offsets, stacked_feature_maps,
                                      spatial_shapes, token_predicted_salience,
                                      token_electron_probs, *, n_heads, n_levels,
                                      n_points, topk_sa):
    del query_ij_indices  # not used by the reference forward
    total, d = queries.shape
    Dp = _round_up(d, LANE)
    Dh = d // n_heads
    hlp = n_heads * n_levels * n_points

    batch_offsets_np = np.asarray(batch_offsets)
    B = int(batch_offsets_np.shape[0])
    lengths = np.diff(np.append(batch_offsets_np, total))
    max_len = int(lengths.max())

    # ---- pad channel dim once (zero pad columns stay zero through every kernel) ----
    q_pad = _pad_cols(queries, Dp)                      # (total, Dp)
    pos_pad = _pad_cols(query_pos_encoding, Dp)

    token_scores = token_electron_probs * jax.nn.sigmoid(token_predicted_salience)

    # ---- deconcat_add_batch_dim as a single precomputed gather (no per-batch loops) ----
    pos_np = np.arange(max_len)[None, :]
    valid_np = pos_np < lengths[:, None]
    gather_np = np.where(valid_np, batch_offsets_np[:, None] + pos_np, 0).astype(np.int32)
    gather_idx = jnp.asarray(gather_np.reshape(-1))
    valid = jnp.asarray(valid_np)
    pad_mask = jnp.asarray(~valid_np)                   # True = pad

    def deconcat(x):
        out = jnp.take(x, gather_idx, axis=0).reshape((B, max_len) + x.shape[1:])
        mask = valid.reshape((B, max_len) + (1,) * (x.ndim - 1))
        return jnp.where(mask, out, 0)

    token_scores_b = deconcat(token_scores)
    q_b = deconcat(q_pad)
    pos_b = deconcat(pos_pad)

    # ---- top-k token selection for self attention ----
    k_sel = min(topk_sa, max_len)
    _, indices = jax.lax.top_k(token_scores_b, k_sel)                    # (B, k_sel)
    sel_pad_mask = jnp.take_along_axis(pad_mask, indices, axis=1)
    idx3 = jnp.broadcast_to(indices[..., None], (B, k_sel, Dp))
    sel_q = jnp.take_along_axis(q_b, idx3, axis=1)                       # (B, k_sel, Dp)
    sel_pos = jnp.take_along_axis(pos_b, idx3, axis=1)

    # ---- self-attention block (fused Pallas path) ----
    Sp = _round_up(k_sel, LANE)                         # lane-dense key/score tiles
    tk = _pick_seq_tile(Sp, 512)
    tq = _pick_seq_tile(Sp, 256)
    sel_q_p = jnp.pad(sel_q, ((0, 0), (0, Sp - k_sel), (0, 0)))
    sel_pos_p = jnp.pad(sel_pos, ((0, 0), (0, Sp - k_sel), (0, 0)))
    sel_mask_p = jnp.pad(sel_pad_mask, ((0, 0), (0, Sp - k_sel)), constant_values=True)

    sa = params["self_attn"]
    q_sa, kv_sa = _call_rowwise(
        functools.partial(_ln_qkv_kernel, d_real=d, d_pad=Dp, eps=1e-5),
        [sel_q_p.reshape(B * Sp, Dp), sel_pos_p.reshape(B * Sp, Dp)],
        [sa["ln_g"], sa["ln_b"], sa["w_qkv"]],
        out_cols=(Dp, 2 * Dp), out_dtypes=(jnp.bfloat16, jnp.bfloat16))
    q_sa = q_sa.reshape(B, Sp, Dp)
    kv_sa = kv_sa.reshape(B, Sp, 2 * Dp)

    bias = jnp.where(sel_mask_p, -1e30, 0.0).astype(jnp.float32).reshape(B, 1, Sp)
    attn = flash_self_attention(q_sa, kv_sa, bias, n_heads=n_heads, d_real=d,
                                d_pad=Dp, tq=tq, tk=tk)

    attn_out = _call_rowwise(
        _proj_res_kernel,
        [attn.reshape(B * Sp, Dp), sel_q_p.reshape(B * Sp, Dp)],
        [sa["wo"], sa["b_o"]],
        out_cols=Dp, out_dtypes=jnp.float32).reshape(B, Sp, Dp)[:, :k_sel]

    # scatter updated tokens back, then remove_batch_dim_and_concat (single gather)
    batch_arange = jnp.arange(B)[:, None]
    q_b = q_b.at[batch_arange, indices].set(attn_out)
    batch_index_np = np.repeat(np.arange(B), lengths).astype(np.int32)
    pos_in_batch_np = (np.arange(total) - batch_offsets_np[batch_index_np]).astype(np.int64)
    flat_idx = jnp.asarray((batch_index_np.astype(np.int64) * max_len
                            + pos_in_batch_np).astype(np.int32))
    queries_2 = jnp.take(q_b.reshape(B * max_len, Dp), flat_idx, axis=0)  # (total, Dp)

    # ---- multi-scale deformable attention block ----
    Tp = _padded_rows(total)
    q2_p = _pad_rows(queries_2, Tp)
    pos_t_p = _pad_rows(pos_pad, Tp)
    refxy_p = _pad_rows(query_normalized_xy_positions.astype(jnp.float32), Tp)
    batch_index_p = jnp.asarray(np.pad(batch_index_np, (0, Tp - total)))

    ms = params["msdeform"]
    sp_par = _call_rowwise(
        functools.partial(_ln_dualproj_kernel, d_real=d, eps=1e-5),
        [q2_p, pos_t_p],
        [ms["ln_g"], ms["ln_b"], ms["w_offaw"], ms["b_offaw"]],
        out_cols=ms["w_offaw"].shape[1], out_dtypes=jnp.float32)          # (Tp, Nsp)
    offs = sp_par[:, :hlp * 2].reshape(Tp, n_heads, n_levels, n_points, 2)
    aw = jax.nn.softmax(
        sp_par[:, hlp * 2:hlp * 3].reshape(Tp, n_heads, n_levels * n_points), axis=-1)
    aw = aw.reshape(Tp, n_heads, n_levels, n_points)

    # value projection of the stacked multi-scale feature maps (bf16 across HBM)
    B_, L_total, _ = stacked_feature_maps.shape
    Mv = B * L_total
    Mvp = _padded_rows(Mv)
    vflat = _pad_rows(_pad_cols(stacked_feature_maps.reshape(Mv, d), Dp), Mvp)
    vproj = _call_rowwise(_linear_kernel, [vflat], [ms["w_v"], ms["b_v"]],
                          out_cols=Dp, out_dtypes=jnp.bfloat16)
    value = vproj[:Mv, :d].reshape(B, L_total, n_heads, Dh)

    # bilinear sampling (grid_sample, zero padding) of the projected values
    # TODO(synk): data-dependent gather stays in plain JAX; a PrefetchScalarGridSpec
    # DMA-gather kernel is the next step if this path dominates wall time.
    spatial_shapes_np = np.asarray(spatial_shapes)
    sizes = np.prod(spatial_shapes_np, axis=1)
    level_starts = np.concatenate([[0], np.cumsum(sizes)[:-1]])

    out = jnp.zeros((Tp, n_heads, Dh), jnp.float32)
    head_idx = jnp.arange(n_heads)[None, :, None]
    bidx = batch_index_p[:, None, None]
    for lvl in range(n_levels):
        H_l = int(spatial_shapes_np[lvl, 0])
        W_l = int(spatial_shapes_np[lvl, 1])
        start = int(level_starts[lvl])
        v_l = value[:, start:start + H_l * W_l].reshape(B, H_l, W_l, n_heads, Dh)

        norm = jnp.array([W_l, H_l], jnp.float32)               # offset normalizer (W, H)
        loc = refxy_p[:, None, None, :] + offs[:, :, lvl, :, :] / norm   # (T, H, P, 2)
        x = loc[..., 0] * W_l - 0.5                             # align_corners=False
        y = loc[..., 1] * H_l - 0.5
        x0 = jnp.floor(x)
        y0 = jnp.floor(y)
        wx1 = x - x0
        wx0 = 1.0 - wx1
        wy1 = y - y0
        wy0 = 1.0 - wy1

        def corner(yy, xx):
            valid_c = (xx >= 0) & (xx < W_l) & (yy >= 0) & (yy < H_l)
            xc = jnp.clip(xx, 0, W_l - 1).astype(jnp.int32)
            yc = jnp.clip(yy, 0, H_l - 1).astype(jnp.int32)
            vals = v_l[bidx, yc, xc, head_idx, :]                # (T, H, P, Dh)
            return vals * valid_c[..., None].astype(jnp.float32)

        sampled = (corner(y0, x0) * (wy0 * wx0)[..., None]
                   + corner(y0, x0 + 1.0) * (wy0 * wx1)[..., None]
                   + corner(y0 + 1.0, x0) * (wy1 * wx0)[..., None]
                   + corner(y0 + 1.0, x0 + 1.0) * (wy1 * wx1)[..., None])
        out = out + jnp.sum(sampled * aw[:, :, lvl, :, None], axis=2)

    samp = _pad_cols(out.reshape(Tp, d), Dp)
    queries_3 = _call_rowwise(_proj_res_kernel, [samp, q2_p],
                              [ms["w_out"], ms["b_out"]],
                              out_cols=Dp, out_dtypes=jnp.float32)        # (Tp, Dp)

    # ---- FFN block (single fused kernel) ----
    ff = params["ffn"]
    queries_4 = _call_rowwise(
        functools.partial(_ffn_kernel, d_real=d, eps=1e-5),
        [queries_3],
        [ff["ln_g"], ff["ln_b"], ff["w1"], ff["b1"], ff["w2"], ff["b2"]],
        out_cols=Dp, out_dtypes=jnp.float32)
    return queries_4[:total, :d]


# --------------------------------------------------------------------------
# Deterministic parameter init (synthetic, raw / un-fused)
# --------------------------------------------------------------------------
def init_params(key, d_model, n_heads, dim_ff, n_levels, n_points):
    keys = iter(jax.random.split(key, 16))

    def w(shape, scale=0.02):
        return jax.random.normal(next(keys), shape, jnp.float32) * scale

    hlp = n_heads * n_levels * n_points
    return {
        "self_attn": {
            "ln_g": jnp.ones((d_model,), jnp.float32),
            "ln_b": jnp.zeros((d_model,), jnp.float32),
            "wq": w((d_model, d_model)), "wk": w((d_model, d_model)),
            "wv": w((d_model, d_model)), "wo": w((d_model, d_model)),
        },
        "msdeform": {
            "ln_g": jnp.ones((d_model,), jnp.float32),
            "ln_b": jnp.zeros((d_model,), jnp.float32),
            "w_v": w((d_model, d_model)), "b_v": jnp.zeros((d_model,), jnp.float32),
            "w_off": w((d_model, hlp * 2)), "b_off": w((hlp * 2,), 0.1),
            "w_aw": w((d_model, hlp)), "b_aw": jnp.zeros((hlp,), jnp.float32),
            "w_out": w((d_model, d_model)), "b_out": jnp.zeros((d_model,), jnp.float32),
        },
        "ffn": {
            "ln_g": jnp.ones((d_model,), jnp.float32),
            "ln_b": jnp.zeros((d_model,), jnp.float32),
            "w1": w((d_model, dim_ff)), "b1": jnp.zeros((dim_ff,), jnp.float32),
            "w2": w((dim_ff, d_model)), "b2": jnp.zeros((d_model,), jnp.float32),
        },
    }


# --------------------------------------------------------------------------
if __name__ == "__main__":
    d_model, n_heads, dim_ff = 32, 4, 64
    n_levels, n_points, topk_sa = 4, 4, 1000

    spatial_shapes = np.array([[8, 8], [4, 4], [2, 2], [1, 1]], np.int32)
    sum_hw = int(np.prod(spatial_shapes, axis=1).sum())      # 85
    batch_offsets = np.array([0, 5], np.int32)                # 2 batch elems: 5 + 4 tokens
    total = 9
    B = 2

    key = jax.random.PRNGKey(0)
    kp, k1, k2, k3, k4, k5, k6 = jax.random.split(key, 7)
    raw_params = init_params(kp, d_model, n_heads, dim_ff, n_levels, n_points)
    params = prepare_params(raw_params, d_model, n_heads, dim_ff, n_levels, n_points)

    queries = jax.random.normal(k1, (total, d_model), jnp.float32)
    query_pos_encoding = jax.random.normal(k2, (total, d_model), jnp.float32)
    query_ij_indices = jnp.zeros((total, 2), jnp.int32)       # unused by forward
    query_normalized_xy = jax.random.uniform(k3, (total, 2), jnp.float32)
    stacked_feature_maps = jax.random.normal(k4, (B, sum_hw, d_model), jnp.float32)
    token_predicted_salience = jax.random.normal(k5, (total,), jnp.float32)
    token_electron_probs = jax.random.uniform(k6, (total,), jnp.float32)

    out = transformer_encoder_layer_forward(
        params, queries, query_pos_encoding, query_ij_indices, query_normalized_xy,
        batch_offsets, stacked_feature_maps, spatial_shapes,
        token_predicted_salience, token_electron_probs,
        n_heads=n_heads, n_levels=n_levels, n_points=n_points, topk_sa=topk_sa)

    out = jax.block_until_ready(out)
    assert out.shape == (total, d_model)
    assert bool(jnp.all(jnp.isfinite(out)))
    print("KERNEL_OK")
</pallas_src>

<mosaic_0001>
module attributes {stable_mosaic.version = 11 : i64} {
  func.func @_ln_qkv_kernel(%arg0: i32, %arg1: memref<128x128xf32, #tpu.memory_space<vmem>>, %arg2: memref<128x128xf32, #tpu.memory_space<vmem>>, %arg3: memref<1x128xf32, #tpu.memory_space<vmem>>, %arg4: memref<1x128xf32, #tpu.memory_space<vmem>>, %arg5: memref<256x384xbf16, #tpu.memory_space<vmem>>, %arg6: memref<128x128xbf16, #tpu.memory_space<vmem>>, %arg7: memref<128x256xbf16, #tpu.memory_space<vmem>>) attributes {dimension_semantics = [#tpu.dimension_semantics<parallel>], iteration_bounds = array<i64: 2>, scalar_prefetch = 0 : i64, scratch_operands = 0 : i64, tpu.core_type = #tpu.core_type<tc>, window_params = [{transform_indices = @transform_0, window_bounds = array<i64: 128, 128>}, {transform_indices = @transform_1, window_bounds = array<i64: 128, 128>}, {pipeline_mode = #tpu.pipeline_mode<synchronous>, transform_indices = @transform_2, window_bounds = array<i64: 1, 128>}, {pipeline_mode = #tpu.pipeline_mode<synchronous>, transform_indices = @transform_3, window_bounds = array<i64: 1, 128>}, {pipeline_mode = #tpu.pipeline_mode<synchronous>, transform_indices = @transform_4, window_bounds = array<i64: 256, 384>}, {transform_indices = @transform_5, window_bounds = array<i64: 128, 128>}, {transform_indices = @transform_6, window_bounds = array<i64: 128, 256>}]} {
    %c0 = arith.constant 0 : index
    %c0_0 = arith.constant 0 : index
    %0 = vector.load %arg1[%c0, %c0_0] : memref<128x128xf32, #tpu.memory_space<vmem>>, vector<128x128xf32>
    %c0_1 = arith.constant 0 : index
    %c0_2 = arith.constant 0 : index
    %1 = vector.load %arg3[%c0_1, %c0_2] : memref<1x128xf32, #tpu.memory_space<vmem>>, vector<1x128xf32>
    %c0_3 = arith.constant 0 : index
    %c0_4 = arith.constant 0 : index
    %2 = vector.load %arg4[%c0_3, %c0_4] : memref<1x128xf32, #tpu.memory_space<vmem>>, vector<1x128xf32>
    %cst = arith.constant dense<0.000000e+00> : vector<128xf32>
    %3 = vector.multi_reduction <add>, %0, %cst [1] : vector<128x128xf32> to vector<128xf32>
    %4 = vector.shape_cast %3 : vector<128xf32> to vector<128x1xf32>
    %5 = arith.mulf %0, %0 : vector<128x128xf32>
    %cst_5 = arith.constant dense<0.000000e+00> : vector<128xf32>
    %6 = vector.multi_reduction <add>, %5, %cst_5 [1] : vector<128x128xf32> to vector<128xf32>
    %7 = vector.shape_cast %6 : vector<128xf32> to vector<128x1xf32>
    %cst_6 = arith.constant 3.125000e-02 : f32
    %8 = vector.broadcast %cst_6 : f32 to vector<128x1xf32>
    %9 = arith.mulf %4, %8 : vector<128x1xf32>
    %cst_7 = arith.constant 3.125000e-02 : f32
    %10 = vector.broadcast %cst_7 : f32 to vector<128x1xf32>
    %11 = arith.mulf %7, %10 : vector<128x1xf32>
    %12 = arith.mulf %9, %9 : vector<128x1xf32>
    %13 = arith.subf %11, %12 : vector<128x1xf32>
    %14 = vector.broadcast %9 : vector<128x1xf32> to vector<128x128xf32>
    %15 = arith.subf %0, %14 : vector<128x128xf32>
    %cst_8 = arith.constant 9.99999974E-6 : f32
    %16 = vector.broadcast %cst_8 : f32 to vector<128x1xf32>
    %17 = arith.addf %13, %16 : vector<128x1xf32>
    %18 = math.rsqrt %17 : vector<128x1xf32>
    %19 = vector.broadcast %18 : vector<128x1xf32> to vector<128x128xf32>
    %20 = arith.mulf %15, %19 : vector<128x128xf32>
    %21 = vector.broadcast %1 : vector<1x128xf32> to vector<128x128xf32>
    %22 = arith.mulf %20, %21 : vector<128x128xf32>
    %23 = vector.broadcast %2 : vector<1x128xf32> to vector<128x128xf32>
    %24 = arith.addf %22, %23 : vector<128x128xf32>
    %c0_9 = arith.constant 0 : index
    %c0_10 = arith.constant 0 : index
    %25 = vector.load %arg2[%c0_9, %c0_10] : memref<128x128xf32, #tpu.memory_space<vmem>>, vector<128x128xf32>
    %26 = tpu.concatenate %24, %25 in 1 : vector<128x128xf32>, vector<128x128xf32> -> vector<128x256xf32>
    %27 = arith.truncf %26 : vector<128x256xf32> to vector<128x256xbf16>
    %c0_11 = arith.constant 0 : index
    %c0_12 = arith.constant 0 : index
    %28 = vector.load %arg5[%c0_11, %c0_12] : memref<256x384xbf16, #tpu.memory_space<vmem>>, vector<256x384xbf16>
    %cst_13 = arith.constant dense<0.000000e+00> : vector<128x384xf32>
    %29 = tpu.matmul %27, %28, %cst_13 {dimension_numbers = #tpu.dot_dimension_numbers<[1], [0], [0], [1], [0, 0, 1, 1], [], []>} : vector<128x256xbf16>, vector<256x384xbf16>, vector<128x384xf32> -> vector<128x384xf32>
    %30 = vector.extract_strided_slice %29 {offsets = [0, 0], sizes = [128, 128], strides = [1, 1]} : vector<128x384xf32> to vector<128x128xf32>
    %31 = arith.truncf %30 : vector<128x128xf32> to vector<128x128xbf16>
    %c0_14 = arith.constant 0 : index
    %c0_15 = arith.constant 0 : index
    %32 = vector.load %arg6[%c0_14, %c0_15] : memref<128x128xbf16, #tpu.memory_space<vmem>>, vector<128x128xbf16>
    tpu.vector_store %arg6[%c0_14, %c0_15], %31 {strides = array<i32>} : memref<128x128xbf16, #tpu.memory_space<vmem>>, vector<128x128xbf16>,
    %33 = vector.extract_strided_slice %29 {offsets = [0, 128], sizes = [128, 256], strides = [1, 1]} : vector<128x384xf32> to vector<128x256xf32>
    %34 = arith.truncf %33 : vector<128x256xf32> to vector<128x256xbf16>
    %c0_16 = arith.constant 0 : index
    %c0_17 = arith.constant 0 : index
    %35 = vector.load %arg7[%c0_16, %c0_17] : memref<128x256xbf16, #tpu.memory_space<vmem>>, vector<128x256xbf16>
    tpu.vector_store %arg7[%c0_16, %c0_17], %34 {strides = array<i32>} : memref<128x256xbf16, #tpu.memory_space<vmem>>, vector<128x256xbf16>,
    return
  }
  func.func @transform_0(%arg0: i32) -> (i32, i32) {
    %c0_i32 = arith.constant 0 : i32
    %c0_i32_0 = arith.constant 0 : i32
    return %arg0, %c0_i32 : i32, i32
  }
  func.func @transform_1(%arg0: i32) -> (i32, i32) {
    %c0_i32 = arith.constant 0 : i32
    %c0_i32_0 = arith.constant 0 : i32
    return %arg0, %c0_i32 : i32, i32
  }
  func.func @transform_2(%arg0: i32) -> (i32, i32) {
    %c0_i32 = arith.constant 0 : i32
    %c0_i32_0 = arith.constant 0 : i32
    %c0_i32_1 = arith.constant 0 : i32
    return %c0_i32, %c0_i32_0 : i32, i32
  }
  func.func @transform_3(%arg0: i32) -> (i32, i32) {
    %c0_i32 = arith.constant 0 : i32
    %c0_i32_0 = arith.constant 0 : i32
    %c0_i32_1 = arith.constant 0 : i32
    return %c0_i32, %c0_i32_0 : i32, i32
  }
  func.func @transform_4(%arg0: i32) -> (i32, i32) {
    %c0_i32 = arith.constant 0 : i32
    %c0_i32_0 = arith.constant 0 : i32
    %c0_i32_1 = arith.constant 0 : i32
    return %c0_i32, %c0_i32_0 : i32, i32
  }
  func.func @transform_5(%arg0: i32) -> (i32, i32) {
    %c0_i32 = arith.constant 0 : i32
    %c0_i32_0 = arith.constant 0 : i32
    return %arg0, %c0_i32 : i32, i32
  }
  func.func @transform_6(%arg0: i32) -> (i32, i32) {
    %c0_i32 = arith.constant 0 : i32
    %c0_i32_0 = arith.constant 0 : i32
    return %arg0, %c0_i32 : i32, i32
  }
}

</mosaic_0001>

<llo_original>
// kernel: tpu_custom_call.1
$region0: #{tpu_custom_call.1}
  #allocation0 [shape = 'u32[]', space=smem, size = 0x4, offset = 0x4, fixed_abs, tag = 'smem constant byte address 0x4 - core index']
  #allocation1 [shape = 'u32[144,128]{1,0:T(1,128)}', space=vmem, size = 0x12000, scoped, tag = 'internal scratch']
  %s0 = inlined_call_operand.hbm [shape: f32[256,128], index: 0, kind: input, shape index: {}]
  %s1 = inlined_call_operand.hbm [shape: f32[256,128], index: 1, kind: input, shape index: {}]
  %s2 = inlined_call_operand.vmem [shape: f32[1,128], index: 2, kind: input, shape index: {}]
  %s3 = inlined_call_operand.vmem [shape: f32[1,128], index: 3, kind: input, shape index: {}]
  %s4 = inlined_call_operand.hbm [shape: bf16[256,384], index: 4, kind: input, shape index: {}]
  %s5 = inlined_call_operand.hbm [shape: bf16[256,128], index: 5, kind: output, shape index: {0}]
  %s6 = inlined_call_operand.hbm [shape: bf16[256,256], index: 6, kind: output, shape index: {1}]
  %7 = xla_tuple %s5, %s6
  %s8 = sld [smem:[#allocation0]]
  $region73: #{tpu_custom_call.1} parent=0
    _
  %s10 = ssub.s32 1, %s8
  %s11 = scalar_select 0, %s10, %s8
  $region1: #{tpu_custom_call.1} parent=0
    #allocation2 [shape = 'u8[131072]{0}', space=vmem, size = 0x20000, scoped, tag = 'input window, operand 0']
    #allocation3 [shape = 's32[2]{0}', space=sflag, size = 0x8, scoped, tag = 'scoped memory for tpu_custom_call.1']
    #allocation4 [shape = 's32[2]{0}', space=sflag, size = 0x8, scoped, tag = 'scoped memory for tpu_custom_call.1']
    #allocation5 [shape = 'u8[131072]{0}', space=vmem, size = 0x20000, scoped, tag = 'input window, operand 1']
    #allocation6 [shape = 's32[2]{0}', space=sflag, size = 0x8, scoped, tag = 'scoped memory for tpu_custom_call.1']
    #allocation7 [shape = 'u8[196608]{0}', space=vmem, size = 0x30000, scoped, tag = 'input window, operand 4, single buffered']
    #allocation8 [shape = 'u8[65536]{0}', space=vmem, size = 0x10000, scoped, tag = 'output window, operand 0']
    #allocation9 [shape = 'u8[131072]{0}', space=vmem, size = 0x20000, scoped, tag = 'output window, operand 1']
    #allocation10 [shape = 's32[2]{0}', space=sflag, size = 0x8, scoped, tag = 'scoped memory for tpu_custom_call.1']
    %12 = vsyncpa [#allocation3], 0
    %s13 = scalar_lea.sflag [#allocation3], 1
    %14 = vsyncpa %s13, 0
    %15 = vsyncpa [#allocation6], 0
    %s16 = scalar_lea.sflag [#allocation6], 1
    %17 = vsyncpa %s16, 0
    %18 = vsyncpa [#allocation4], 0
    %s19 = scalar_lea.sflag [#allocation4], 1
    %20 = vsyncpa %s19, 0
    %21 = vsyncpa [#allocation10], 0
    %s22 = scalar_lea.sflag [#allocation10], 1
    %23 = vsyncpa %s22, 0
    loop: start=0, step=1, limit=4
    $region2: #{tpu_custom_call.1} parent=1 // loop_pre_header
      _
    $region3: #{tpu_custom_call.1} parent=1 // loop_header
      %s25 = sphi 0, %s29
      %p26 = scmp.ge.s32.totalorder %s25, 4
      %s35 = sphi 0, %s37
      %s38 = sphi 0, %s35
      %s39 = sphi 0, %s38
      %s55 = sphi 0, %s39
      %s61 = sphi 0, %s63
      %s64 = sphi 0, %s61
      %s65 = sphi 0, %s64
      %s81 = sphi 0, %s65
      %s85 = sphi 0, %s85
      %s87 = sphi 0, %s85
      %s88 = sphi 0, %s87
      %s102 = sphi 0, %s88
      %s106 = sphi 0, %s106
      %s108 = sphi 0, %s106
      %s109 = sphi 0, %s108
      %s123 = sphi 0, %s109
      %s127 = sphi 0, %s127
      %s129 = sphi 0, %s127
      %s130 = sphi 0, %s129
      %s144 = sphi 0, %s130
      %s150 = sphi 0, %s152
      %s153 = sphi 0, %s150
      %s154 = sphi 0, %s153
      %s170 = sphi 0, %s154
      %s176 = sphi 0, %s178
      %s179 = sphi 0, %s176
      %s180 = sphi 0, %s179
      %s196 = sphi 0, %s180
    $region4: #{tpu_custom_call.1} parent=1 // loop_header_branch
      %28 = sbr.rel (%p26) target = $region8
    $region5: #{tpu_custom_call.1} parent=1 // loop_body
      %s30 = ssub.s32 %s25, 1
      %s31 = ssub.s32 %s25, 2
      %s32 = sadd.s32 %s25, 1
      %s33 = ssub.s32 %s25, %s32
      %p34 = scmp.eq.s32.totalorder %s33, 0
      %s36 = sadd.s32 %s35, 1
      %s37 = scalar_select %p34, %s35, %s36
      %p40 = pneg %p34
      %p41 = scmp.eq.s32.totalorder %s25, 1
      %p42 = por %p40, %p41
      %p43 = scmp.ne.s32.totalorder %s35, %s38
      %p44 = scmp.eq.s32.totalorder %s25, 0
      %p45 = por %p43, %p44
      %p46 = scmp.ne.s32.totalorder %s35, %s38
      %p47 = scmp.eq.s32.totalorder %s30, 1
      %p48 = por %p46, %p47
      %p49 = scmp.ne.s32.totalorder %s38, %s39
      %p50 = scmp.eq.s32.totalorder %s30, 0
      %p51 = por %p49, %p50
      %p52 = scmp.ne.s32.totalorder %s38, %s39
      %p53 = scmp.eq.s32.totalorder %s31, 1
      %p54 = por %p52, %p53
      %p56 = scmp.ne.s32.totalorder %s39, %s55
      %p57 = scmp.eq.s32.totalorder %s31, 0
      %p58 = por %p56, %p57
      %s59 = ssub.s32 %s25, %s32
      %p60 = scmp.eq.s32.totalorder %s59, 0
      %s62 = sadd.s32 %s61, 1
      %s63 = scalar_select %p60, %s61, %s62
      %p66 = pneg %p60
      %p67 = scmp.eq.s32.totalorder %s25, 1
      %p68 = por %p66, %p67
      %p69 = scmp.ne.s32.totalorder %s61, %s64
      %p70 = scmp.eq.s32.totalorder %s25, 0
      %p71 = por %p69, %p70
      %p72 = scmp.ne.s32.totalorder %s61, %s64
      %p73 = scmp.eq.s32.totalorder %s30, 1
      %p74 = por %p72, %p73
      %p75 = scmp.ne.s32.totalorder %s64, %s65
      %p76 = scmp.eq.s32.totalorder %s30, 0
      %p77 = por %p75, %p76
      %p78 = scmp.ne.s32.totalorder %s64, %s65
      %p79 = scmp.eq.s32.totalorder %s31, 1
      %p80 = por %p78, %p79
      %p82 = scmp.ne.s32.totalorder %s65, %s81
      %p83 = scmp.eq.s32.totalorder %s31, 0
      %p84 = por %p82, %p83
      %s86 = sadd.s32 %s85, 1
      %p89 = scmp.eq.s32.totalorder %s25, 1
      %p90 = scmp.ne.s32.totalorder %s85, %s87
      %p91 = scmp.eq.s32.totalorder %s25, 0
      %p92 = por %p90, %p91
      %p93 = scmp.ne.s32.totalorder %s85, %s87
      %p94 = scmp.eq.s32.totalorder %s30, 1
      %p95 = por %p93, %p94
      %p96 = scmp.ne.s32.totalorder %s87, %s88
      %p97 = scmp.eq.s32.totalorder %s30, 0
      %p98 = por %p96, %p97
      %p99 = scmp.ne.s32.totalorder %s87, %s88
      %p100 = scmp.eq.s32.totalorder %s31, 1
      %p101 = por %p99, %p100
      %p103 = scmp.ne.s32.totalorder %s88, %s102
      %p104 = scmp.eq.s32.totalorder %s31, 0
      %p105 = por %p103, %p104
      %s107 = sadd.s32 %s106, 1
      %p110 = scmp.eq.s32.totalorder %s25, 1
      %p111 = scmp.ne.s32.totalorder %s106, %s108
      %p112 = scmp.eq.s32.totalorder %s25, 0
      %p113 = por %p111, %p112
      %p114 = scmp.ne.s32.totalorder %s106, %s108
      %p115 = scmp.eq.s32.totalorder %s30, 1
      %p116 = por %p114, %p115
      %p117 = scmp.ne.s32.totalorder %s108, %s109
      %p118 = scmp.eq.s32.totalorder %s30, 0
      %p119 = por %p117, %p118
      %p120 = scmp.ne.s32.totalorder %s108, %s109
      %p121 = scmp.eq.s32.totalorder %s31, 1
      %p122 = por %p120, %p121
      %p124 = scmp.ne.s32.totalorder %s109, %s123
      %p125 = scmp.eq.s32.totalorder %s31, 0
      %p126 = por %p124, %p125
      %s128 = sadd.s32 %s127, 1
      %p131 = scmp.eq.s32.totalorder %s25, 1
      %p132 = scmp.ne.s32.totalorder %s127, %s129
      %p133 = scmp.eq.s32.totalorder %s25, 0
      %p134 = por %p132, %p133
      %p135 = scmp.ne.s32.totalorder %s127, %s129
      %p136 = scmp.eq.s32.totalorder %s30, 1
      %p137 = por %p135, %p136
      %p138 = scmp.ne.s32.totalorder %s129, %s130
      %p139 = scmp.eq.s32.totalorder %s30, 0
      %p140 = por %p138, %p139
      %p141 = scmp.ne.s32.totalorder %s129, %s130
      %p142 = scmp.eq.s32.totalorder %s31, 1
      %p143 = por %p141, %p142
      %p145 = scmp.ne.s32.totalorder %s130, %s144
      %p146 = scmp.eq.s32.totalorder %s31, 0
      %p147 = por %p145, %p146
      %s148 = ssub.s32 %s25, %s32
      %p149 = scmp.eq.s32.totalorder %s148, 0
      %s151 = sadd.s32 %s150, 1
      %s152 = scalar_select %p149, %s150, %s151
      %p155 = pneg %p149
      %p156 = scmp.eq.s32.totalorder %s25, 1
      %p157 = por %p155, %p156
      %p158 = scmp.ne.s32.totalorder %s150, %s153
      %p159 = scmp.eq.s32.totalorder %s25, 0
      %p160 = por %p158, %p159
      %p161 = scmp.ne.s32.totalorder %s150, %s153
      %p162 = scmp.eq.s32.totalorder %s30, 1
      %p163 = por %p161, %p162
      %p164 = scmp.ne.s32.totalorder %s153, %s154
      %p165 = scmp.eq.s32.totalorder %s30, 0
      %p166 = por %p164, %p165
      %p167 = scmp.ne.s32.totalorder %s153, %s154
      %p168 = scmp.eq.s32.totalorder %s31, 1
      %p169 = por %p167, %p168
      %p171 = scmp.ne.s32.totalorder %s154, %s170
      %p172 = scmp.eq.s32.totalorder %s31, 0
      %p173 = por %p171, %p172
      %s174 = ssub.s32 %s25, %s32
      %p175 = scmp.eq.s32.totalorder %s174, 0
      %s177 = sadd.s32 %s176, 1
      %s178 = scalar_select %p175, %s176, %s177
      %p181 = pneg %p175
      %p182 = scmp.eq.s32.totalorder %s25, 1
      %p183 = por %p181, %p182
      %p184 = scmp.ne.s32.totalorder %s176, %s179
      %p185 = scmp.eq.s32.totalorder %s25, 0
      %p186 = por %p184, %p185
      %p187 = scmp.ne.s32.totalorder %s176, %s179
      %p188 = scmp.eq.s32.totalorder %s30, 1
      %p189 = por %p187, %p188
      %p190 = scmp.ne.s32.totalorder %s179, %s180
      %p191 = scmp.eq.s32.totalorder %s30, 0
      %p192 = por %p190, %p191
      %p193 = scmp.ne.s32.totalorder %s179, %s180
      %p194 = scmp.eq.s32.totalorder %s31, 1
      %p195 = por %p193, %p194
      %p197 = scmp.ne.s32.totalorder %s180, %s196
      %p198 = scmp.eq.s32.totalorder %s31, 0
      %p199 = por %p197, %p198
      %p200 = scmp.le.s32.totalorder 1, %s25
      %p201 = scmp.lt.s32.totalorder %s25, 3
      %p202 = pnand %p200, %p201
      %p203 = pneg %p202
      // Predicated region
      $region9: #{tpu_custom_call.1} parent=5 // pred_check
        _
      $region10: #{tpu_custom_call.1} parent=5 // pred_check_branch
        %205 = sbr.rel (%p202) target = $region12
      $region11: #{tpu_custom_call.1} parent=5 // pred_region
        %s206 = ssub.s32 %s25, 1
        // Predicated region
        $region13: #{tpu_custom_call.1} parent=11 // pred_check
          %p207 = pneg %p98
        $region14: #{tpu_custom_call.1} parent=11 // pred_check_branch
          %209 = sbr.rel (%p207) target = $region16
        $region15: #{tpu_custom_call.1} parent=11 // pred_region
          _
        $region16: #{tpu_custom_call.1} parent=11 // pred_fallthru
          _
        // Predicated region
        $region17: #{tpu_custom_call.1} parent=11 // pred_check
          %p210 = pneg %p119
        $region18: #{tpu_custom_call.1} parent=11 // pred_check_branch
          %212 = sbr.rel (%p210) target = $region20
        $region19: #{tpu_custom_call.1} parent=11 // pred_region
          _
        $region20: #{tpu_custom_call.1} parent=11 // pred_fallthru
          _
        // Predicated region
        $region21: #{tpu_custom_call.1} parent=11 // pred_check
          %p213 = pneg %p140
        $region22: #{tpu_custom_call.1} parent=11 // pred_check_branch
          %215 = sbr.rel (%p213) target = $region24
        $region23: #{tpu_custom_call.1} parent=11 // pred_region
          %s217 = ssub.s32 6144, 6144
          %218 = vsyncadd [#allocation6], %s217
          %s219 = sshll.u32 [#allocation7], 4
          %s220 = int_to_ptr.vmem [resolvable:$true] %s219
          %225 = dma.hbm_to_vmem [thread:$0]  %s4, 6144, %s220, [#allocation6], 192, 192, 12
        $region24: #{tpu_custom_call.1} parent=11 // pred_fallthru
          _
      $region12: #{tpu_custom_call.1} parent=5 // pred_fallthru
        _
      %p226 = scmp.lt.s32.totalorder %s25, 2
      // Predicated region
      $region25: #{tpu_custom_call.1} parent=5 // pred_check
        %p227 = pneg %p226
      $region26: #{tpu_custom_call.1} parent=5 // pred_check_branch
        %229 = sbr.rel (%p227) target = $region28
      $region27: #{tpu_custom_call.1} parent=5 // pred_region
        // Predicated region
        $region29: #{tpu_custom_call.1} parent=27 // pred_check
          %p230 = pneg %p45
        $region30: #{tpu_custom_call.1} parent=27 // pred_check_branch
          %232 = sbr.rel (%p230) target = $region32
        $region31: #{tpu_custom_call.1} parent=27 // pred_region
          %s233 = sand.u32 %s35, 1
          %s234 = scalar_lea.sflag [#allocation3], %s233
          %s235 = sand.u32 %s35, 1
          %s236 = smul.addr %s235, 128
          %s237 = scalar_lea.vmem [#allocation2], %s236
          %s238 = smul.u32 16, %s25
          %s240 = ssub.s32 2048, 2048
          %241 = vsyncadd %s234, %s240
          %s242 = smul.addr %s238, 128
          %s243 = scalar_lea.hbm %s0, %s242
          %s244 = sshll.u32 %s237, 4
          %s245 = int_to_ptr.vmem [resolvable:$true] %s244
          %250 = dma.hbm_to_vmem [thread:$0]  %s243, 2048, %s245, %s234, 128, 128, 8
        $region32: #{tpu_custom_call.1} parent=27 // pred_fallthru
          _
        // Predicated region
        $region33: #{tpu_custom_call.1} parent=27 // pred_check
          %p251 = pneg %p71
        $region34: #{tpu_custom_call.1} parent=27 // pred_check_branch
          %253 = sbr.rel (%p251) target = $region36
        $region35: #{tpu_custom_call.1} parent=27 // pred_region
          %s254 = sand.u32 %s25, 1
          %s255 = scalar_lea.sflag [#allocation6], %s254
          %s256 = sand.u32 %s61, 1
          %s257 = smul.addr %s256, 128
          %s258 = scalar_lea.vmem [#allocation5], %s257
          %s259 = smul.u32 16, %s25
          %s261 = ssub.s32 2048, 2048
          %262 = vsyncadd %s255, %s261
          %s263 = smul.addr %s259, 128
          %s264 = scalar_lea.hbm %s1, %s263
          %s265 = sshll.u32 %s258, 4
          %s266 = int_to_ptr.vmem [resolvable:$true] %s265
          %271 = dma.hbm_to_vmem [thread:$0]  %s264, 2048, %s266, %s255, 128, 128, 8
        $region36: #{tpu_custom_call.1} parent=27 // pred_fallthru
          _
      $region28: #{tpu_custom_call.1} parent=5 // pred_fallthru
        _
      %p272 = scmp.le.s32.totalorder 1, %s25
      %p273 = scmp.lt.s32.totalorder %s25, 3
      %p274 = pnand %p272, %p273
      %p275 = pneg %p274
      // Predicated region
      $region37: #{tpu_custom_call.1} parent=5 // pred_check
        _
      $region38: #{tpu_custom_call.1} parent=5 // pred_check_branch
        %277 = sbr.rel (%p274) target = $region40
      $region39: #{tpu_custom_call.1} parent=5 // pred_region
        %s278 = ssub.s32 %s25, 1
        %s279 = sand.u32 %s38, 1
        %s280 = scalar_lea.sflag [#allocation3], %s279
        %s281 = sand.u32 %s38, 1
        %s282 = smul.addr %s281, 128
        %s283 = scalar_lea.vmem [#allocation2], %s282
        // Predicated region
        $region41: #{tpu_custom_call.1} parent=39 // pred_check
          %p284 = pneg %p51
        $region42: #{tpu_custom_call.1} parent=39 // pred_check_branch
          %286 = sbr.rel (%p284) target = $region44
        $region43: #{tpu_custom_call.1} parent=39 // pred_region
          %287 = dma.done %s280, 2048
        $region44: #{tpu_custom_call.1} parent=39 // pred_fallthru
          _
        %s288 = sand.u32 %s30, 1
        %s289 = scalar_lea.sflag [#allocation6], %s288
        %s290 = sand.u32 %s64, 1
        %s291 = smul.addr %s290, 128
        %s292 = scalar_lea.vmem [#allocation5], %s291
        // Predicated region
        $region45: #{tpu_custom_call.1} parent=39 // pred_check
          %p293 = pneg %p77
        $region46: #{tpu_custom_call.1} parent=39 // pred_check_branch
          %295 = sbr.rel (%p293) target = $region48
        $region47: #{tpu_custom_call.1} parent=39 // pred_region
          %296 = dma.done %s289, 2048
        $region48: #{tpu_custom_call.1} parent=39 // pred_fallthru
          _
        // Predicated region
        $region49: #{tpu_custom_call.1} parent=39 // pred_check
          %p297 = pneg %p140
        $region50: #{tpu_custom_call.1} parent=39 // pred_check_branch
          %299 = sbr.rel (%p297) target = $region52
        $region51: #{tpu_custom_call.1} parent=39 // pred_region
          %300 = dma.done [#allocation6], 6144
        $region52: #{tpu_custom_call.1} parent=39 // pred_fallthru
          _
        %s301 = sand.u32 %s38, 1
        %s302 = scalar_lea.sflag [#allocation3], %s301
        %s303 = sand.u32 %s38, 1
        %s304 = smul.addr %s303, 128
        %s305 = scalar_lea.vmem [#allocation2], %s304
        %p306 = pneg %p51
        %p307 = pneg %p48
        %s308 = sand.u32 %s30, 1
        %s309 = scalar_lea.sflag [#allocation6], %s308
        %s310 = sand.u32 %s64, 1
        %s311 = smul.addr %s310, 128
        %s312 = scalar_lea.vmem [#allocation5], %s311
        %p313 = pneg %p77
        %p314 = pneg %p74
        %p315 = pneg %p98
        %p316 = pneg %p95
        %p317 = pneg %p119
        %p318 = pneg %p116
        %p319 = pneg %p140
        %p320 = pneg %p137
        %p321 = pneg %p166
        %p322 = pneg %p163
        %s323 = sand.u32 %s153, 1
        %s324 = scalar_lea.sflag [#allocation4], %s323
        %s325 = sand.u32 %s153, 1
        %s326 = smul.addr %s325, 64
        %s327 = scalar_lea.vmem [#allocation8], %s326
        %p328 = pneg %p192
        %p329 = pneg %p189
        %s330 = sand.u32 %s179, 1
        %s331 = scalar_lea.sflag [#allocation10], %s330
        %s332 = sand.u32 %s179, 1
        %s333 = smul.addr %s332, 128
        %s334 = scalar_lea.vmem [#allocation9], %s333
        %s335 = smul.u32 16, %s30
        %s336 = smul.u32 16, %s30
        %s337 = smul.u32 16, %s30
        %s338 = smul.u32 16, %s30
        %v340 = vld [vmem:[%s283] sm:$0xff]
        %v341 = vld [vmem:[%s283 + $0x8] sm:$0xff]
        %v342 = vld [vmem:[%s283 + $0x10] sm:$0xff]
        %v343 = vld [vmem:[%s283 + $0x18] sm:$0xff]
        %v344 = vld [vmem:[%s283 + $0x20] sm:$0xff]
        %v345 = vld [vmem:[%s283 + $0x28] sm:$0xff]
        %v346 = vld [vmem:[%s283 + $0x30] sm:$0xff]
        %v347 = vld [vmem:[%s283 + $0x38] sm:$0xff]
        %v348 = vld [vmem:[%s283 + $0x40] sm:$0xff]
        %v349 = vld [vmem:[%s283 + $0x48] sm:$0xff]
        %v350 = vld [vmem:[%s283 + $0x50] sm:$0xff]
        %v351 = vld [vmem:[%s283 + $0x58] sm:$0xff]
        %v352 = vld [vmem:[%s283 + $0x60] sm:$0xff]
        %v353 = vld [vmem:[%s283 + $0x68] sm:$0xff]
        %v354 = vld [vmem:[%s283 + $0x70] sm:$0xff]
        %v355 = vld [vmem:[%s283 + $0x78] sm:$0xff]
        %v356 = vld [vmem:[%s2] sm:$0x1]
        %v357 = vld [vmem:[%s3] sm:$0x1]
        %358 = vadd.xlane.f32.xlu0 %v340
        %v359 = vpop.xlane.xlu0 %358
        %360 = vadd.xlane.f32.xlu0 %v341
        %v361 = vpop.xlane.xlu0 %360
        %362 = vadd.xlane.f32.xlu0 %v342
        %v363 = vpop.xlane.xlu0 %362
        %364 = vadd.xlane.f32.xlu0 %v343
        %v365 = vpop.xlane.xlu0 %364
        %366 = vadd.xlane.f32.xlu0 %v344
        %v367 = vpop.xlane.xlu0 %366
        %368 = vadd.xlane.f32.xlu0 %v345
        %v369 = vpop.xlane.xlu0 %368
        %370 = vadd.xlane.f32.xlu0 %v346
        %v371 = vpop.xlane.xlu0 %370
        %372 = vadd.xlane.f32.xlu0 %v347
        %v373 = vpop.xlane.xlu0 %372
        %374 = vadd.xlane.f32.xlu0 %v348
        %v375 = vpop.xlane.xlu0 %374
        %376 = vadd.xlane.f32.xlu0 %v349
        %v377 = vpop.xlane.xlu0 %376
        %378 = vadd.xlane.f32.xlu0 %v350
        %v379 = vpop.xlane.xlu0 %378
        %380 = vadd.xlane.f32.xlu0 %v351
        %v381 = vpop.xlane.xlu0 %380
        %382 = vadd.xlane.f32.xlu0 %v352
        %v383 = vpop.xlane.xlu0 %382
        %384 = vadd.xlane.f32.xlu0 %v353
        %v385 = vpop.xlane.xlu0 %384
        %386 = vadd.xlane.f32.xlu0 %v354
        %v387 = vpop.xlane.xlu0 %386
        %388 = vadd.xlane.f32.xlu0 %v355
        %v389 = vpop.xlane.xlu0 %388
        %v390 = vmul.f32 %v340, %v340
        %v391 = vmul.f32 %v341, %v341
        %v392 = vmul.f32 %v342, %v342
        %v393 = vmul.f32 %v343, %v343
        %v394 = vmul.f32 %v344, %v344
        %v395 = vmul.f32 %v345, %v345
        %v396 = vmul.f32 %v346, %v346
        %v397 = vmul.f32 %v347, %v347
        %v398 = vmul.f32 %v348, %v348
        %v399 = vmul.f32 %v349, %v349
        %v400 = vmul.f32 %v350, %v350
        %v401 = vmul.f32 %v351, %v351
        %v402 = vmul.f32 %v352, %v352
        %v403 = vmul.f32 %v353, %v353
        %v404 = vmul.f32 %v354, %v354
        %v405 = vmul.f32 %v355, %v355
        %406 = vadd.xlane.f32.xlu0 %v390
        %v407 = vpop.xlane.xlu0 %406
        %408 = vadd.xlane.f32.xlu0 %v391
        %v409 = vpop.xlane.xlu0 %408
        %410 = vadd.xlane.f32.xlu0 %v392
        %v411 = vpop.xlane.xlu0 %410
        %412 = vadd.xlane.f32.xlu0 %v393
        %v413 = vpop.xlane.xlu0 %412
        %414 = vadd.xlane.f32.xlu0 %v394
        %v415 = vpop.xlane.xlu0 %414
        %416 = vadd.xlane.f32.xlu0 %v395
        %v417 = vpop.xlane.xlu0 %416
        %418 = vadd.xlane.f32.xlu0 %v396
        %v419 = vpop.xlane.xlu0 %418
        %420 = vadd.xlane.f32.xlu0 %v397
        %v421 = vpop.xlane.xlu0 %420
        %422 = vadd.xlane.f32.xlu0 %v398
        %v423 = vpop.xlane.xlu0 %422
        %424 = vadd.xlane.f32.xlu0 %v399
        %v425 = vpop.xlane.xlu0 %424
        %426 = vadd.xlane.f32.xlu0 %v400
        %v427 = vpop.xlane.xlu0 %426
        %428 = vadd.xlane.f32.xlu0 %v401
        %v429 = vpop.xlane.xlu0 %428
        %430 = vadd.xlane.f32.xlu0 %v402
        %v431 = vpop.xlane.xlu0 %430
        %432 = vadd.xlane.f32.xlu0 %v403
        %v433 = vpop.xlane.xlu0 %432
        %434 = vadd.xlane.f32.xlu0 %v404
        %v435 = vpop.xlane.xlu0 %434
        %436 = vadd.xlane.f32.xlu0 %v405
        %v437 = vpop.xlane.xlu0 %436
        %v438 = vmul.f32 %v359, 0.03125
        %v439 = vmul.f32 %v361, 0.03125
        %v440 = vmul.f32 %v363, 0.03125
        %v441 = vmul.f32 %v365, 0.03125
        %v442 = vmul.f32 %v367, 0.03125
        %v443 = vmul.f32 %v369, 0.03125
        %v444 = vmul.f32 %v371, 0.03125
        %v445 = vmul.f32 %v373, 0.03125
        %v446 = vmul.f32 %v375, 0.03125
        %v447 = vmul.f32 %v377, 0.03125
        %v448 = vmul.f32 %v379, 0.03125
        %v449 = vmul.f32 %v381, 0.03125
        %v450 = vmul.f32 %v383, 0.03125
        %v451 = vmul.f32 %v385, 0.03125
        %v452 = vmul.f32 %v387, 0.03125
        %v453 = vmul.f32 %v389, 0.03125
        %v454 = vmul.f32 %v407, 0.03125
        %v455 = vmul.f32 %v409, 0.03125
        %v456 = vmul.f32 %v411, 0.03125
        %v457 = vmul.f32 %v413, 0.03125
        %v458 = vmul.f32 %v415, 0.03125
        %v459 = vmul.f32 %v417, 0.03125
        %v460 = vmul.f32 %v419, 0.03125
        %v461 = vmul.f32 %v421, 0.03125
        %v462 = vmul.f32 %v423, 0.03125
        %v463 = vmul.f32 %v425, 0.03125
        %v464 = vmul.f32 %v427, 0.03125
        %v465 = vmul.f32 %v429, 0.03125
        %v466 = vmul.f32 %v431, 0.03125
        %v467 = vmul.f32 %v433, 0.03125
        %v468 = vmul.f32 %v435, 0.03125
        %v469 = vmul.f32 %v437, 0.03125
        %v470 = vmul.f32 %v438, %v438
        %v471 = vmul.f32 %v439, %v439
        %v472 = vmul.f32 %v440, %v440
        %v473 = vmul.f32 %v441, %v441
        %v474 = vmul.f32 %v442, %v442
        %v475 = vmul.f32 %v443, %v443
        %v476 = vmul.f32 %v444, %v444
        %v477 = vmul.f32 %v445, %v445
        %v478 = vmul.f32 %v446, %v446
        %v479 = vmul.f32 %v447, %v447
        %v480 = vmul.f32 %v448, %v448
        %v481 = vmul.f32 %v449, %v449
        %v482 = vmul.f32 %v450, %v450
        %v483 = vmul.f32 %v451, %v451
        %v484 = vmul.f32 %v452, %v452
        %v485 = vmul.f32 %v453, %v453
        %v486 = vsub.f32 %v454, %v470
        %v487 = vsub.f32 %v455, %v471
        %v488 = vsub.f32 %v456, %v472
        %v489 = vsub.f32 %v457, %v473
        %v490 = vsub.f32 %v458, %v474
        %v491 = vsub.f32 %v459, %v475
        %v492 = vsub.f32 %v460, %v476
        %v493 = vsub.f32 %v461, %v477
        %v494 = vsub.f32 %v462, %v478
        %v495 = vsub.f32 %v463, %v479
        %v496 = vsub.f32 %v464, %v480
        %v497 = vsub.f32 %v465, %v481
        %v498 = vsub.f32 %v466, %v482
        %v499 = vsub.f32 %v467, %v483
        %v500 = vsub.f32 %v468, %v484
        %v501 = vsub.f32 %v469, %v485
        %v502 = vsub.f32 %v340, %v438
        %v503 = vsub.f32 %v341, %v439
        %v504 = vsub.f32 %v342, %v440
        %v505 = vsub.f32 %v343, %v441
        %v506 = vsub.f32 %v344, %v442
        %v507 = vsub.f32 %v345, %v443
        %v508 = vsub.f32 %v346, %v444
        %v509 = vsub.f32 %v347, %v445
        %v510 = vsub.f32 %v348, %v446
        %v511 = vsub.f32 %v349, %v447
        %v512 = vsub.f32 %v350, %v448
        %v513 = vsub.f32 %v351, %v449
        %v514 = vsub.f32 %v352, %v450
        %v515 = vsub.f32 %v353, %v451
        %v516 = vsub.f32 %v354, %v452
        %v517 = vsub.f32 %v355, %v453
        %v518 = vadd.f32 %v486, 1e-05
        %v519 = vadd.f32 %v487, 1e-05
        %v520 = vadd.f32 %v488, 1e-05
        %v521 = vadd.f32 %v489, 1e-05
        %v522 = vadd.f32 %v490, 1e-05
        %v523 = vadd.f32 %v491, 1e-05
        %v524 = vadd.f32 %v492, 1e-05
        %v525 = vadd.f32 %v493, 1e-05
        %v526 = vadd.f32 %v494, 1e-05
        %v527 = vadd.f32 %v495, 1e-05
        %v528 = vadd.f32 %v496, 1e-05
        %v529 = vadd.f32 %v497, 1e-05
        %v530 = vadd.f32 %v498, 1e-05
        %v531 = vadd.f32 %v499, 1e-05
        %v532 = vadd.f32 %v500, 1e-05
        %v533 = vadd.f32 %v501, 1e-05
        %v534 = vrsqrt.pop %v518
        %v535 = vrsqrt.pop %v519
        %v536 = vrsqrt.pop %v520
        %v537 = vrsqrt.pop %v521
        %v538 = vrsqrt.pop %v522
        %v539 = vrsqrt.pop %v523
        %v540 = vrsqrt.pop %v524
        %v541 = vrsqrt.pop %v525
        %v542 = vrsqrt.pop %v526
        %v543 = vrsqrt.pop %v527
        %v544 = vrsqrt.pop %v528
        %v545 = vrsqrt.pop %v529
        %v546 = vrsqrt.pop %v530
        %v547 = vrsqrt.pop %v531
        %v548 = vrsqrt.pop %v532
        %v549 = vrsqrt.pop %v533
        %v550 = vmul.f32 %v502, %v534
        %v551 = vmul.f32 %v503, %v535
        %v552 = vmul.f32 %v504, %v536
        %v553 = vmul.f32 %v505, %v537
        %v554 = vmul.f32 %v506, %v538
        %v555 = vmul.f32 %v507, %v539
        %v556 = vmul.f32 %v508, %v540
        %v557 = vmul.f32 %v509, %v541
        %v558 = vmul.f32 %v510, %v542
        %v559 = vmul.f32 %v511, %v543
        %v560 = vmul.f32 %v512, %v544
        %v561 = vmul.f32 %v513, %v545
        %v562 = vmul.f32 %v514, %v546
        %v563 = vmul.f32 %v515, %v547
        %v564 = vmul.f32 %v516, %v548
        %v565 = vmul.f32 %v517, %v549
        %v567 = vlaneseq
        %v568 = vshrl.u32 %v567, 7
        %v569 = vsub.s32 0, %v568
        %v570 = vrot.slane %v356, %v569
        %v572 = vmul.f32 %v550, %v570
        %v573 = vmul.f32 %v551, %v570
        %v574 = vmul.f32 %v552, %v570
        %v575 = vmul.f32 %v553, %v570
        %v576 = vmul.f32 %v554, %v570
        %v577 = vmul.f32 %v555, %v570
        %v578 = vmul.f32 %v556, %v570
        %v579 = vmul.f32 %v557, %v570
        %v580 = vmul.f32 %v558, %v570
        %v581 = vmul.f32 %v559, %v570
        %v582 = vmul.f32 %v560, %v570
        %v583 = vmul.f32 %v561, %v570
        %v584 = vmul.f32 %v562, %v570
        %v585 = vmul.f32 %v563, %v570
        %v586 = vmul.f32 %v564, %v570
        %v587 = vmul.f32 %v565, %v570
        %v589 = vlaneseq
        %v590 = vshrl.u32 %v589, 7
        %v591 = vsub.s32 0, %v590
        %v592 = vrot.slane %v357, %v591
        %v594 = vadd.f32 %v572, %v592
        %v595 = vadd.f32 %v573, %v592
        %v596 = vadd.f32 %v574, %v592
        %v597 = vadd.f32 %v575, %v592
        %v598 = vadd.f32 %v576, %v592
        %v599 = vadd.f32 %v577, %v592
        %v600 = vadd.f32 %v578, %v592
        %v601 = vadd.f32 %v579, %v592
        %v602 = vadd.f32 %v580, %v592
        %v603 = vadd.f32 %v581, %v592
        %v604 = vadd.f32 %v582, %v592
        %v605 = vadd.f32 %v583, %v592
        %v606 = vadd.f32 %v584, %v592
        %v607 = vadd.f32 %v585, %v592
        %v608 = vadd.f32 %v586, %v592
        %v609 = vadd.f32 %v587, %v592
        %v610 = vld [vmem:[%s292] sm:$0xff]
        %v611 = vld [vmem:[%s292 + $0x8] sm:$0xff]
        %v612 = vld [vmem:[%s292 + $0x10] sm:$0xff]
        %v613 = vld [vmem:[%s292 + $0x18] sm:$0xff]
        %v614 = vld [vmem:[%s292 + $0x20] sm:$0xff]
        %v615 = vld [vmem:[%s292 + $0x28] sm:$0xff]
        %v616 = vld [vmem:[%s292 + $0x30] sm:$0xff]
        %v617 = vld [vmem:[%s292 + $0x38] sm:$0xff]
        %v618 = vld [vmem:[%s292 + $0x40] sm:$0xff]
        %v619 = vld [vmem:[%s292 + $0x48] sm:$0xff]
        %v620 = vld [vmem:[%s292 + $0x50] sm:$0xff]
        %v621 = vld [vmem:[%s292 + $0x58] sm:$0xff]
        %v622 = vld [vmem:[%s292 + $0x60] sm:$0xff]
        %v623 = vld [vmem:[%s292 + $0x68] sm:$0xff]
        %v624 = vld [vmem:[%s292 + $0x70] sm:$0xff]
        %v625 = vld [vmem:[%s292 + $0x78] sm:$0xff]
        %v626 = vpack.c.bf16 %v595, %v594
        %v627 = vpack.c.bf16 %v611, %v610
        %v628 = vpack.c.bf16 %v597, %v596
        %v629 = vpack.c.bf16 %v613, %v612
        %v630 = vpack.c.bf16 %v599, %v598
        %v631 = vpack.c.bf16 %v615, %v614
        %v632 = vpack.c.bf16 %v601, %v600
        %v633 = vpack.c.bf16 %v617, %v616
        %v634 = vpack.c.bf16 %v603, %v602
        %v635 = vpack.c.bf16 %v619, %v618
        %v636 = vpack.c.bf16 %v605, %v604
        %v637 = vpack.c.bf16 %v621, %v620
        %v638 = vpack.c.bf16 %v607, %v606
        %v639 = vpack.c.bf16 %v623, %v622
        %v640 = vpack.c.bf16 %v609, %v608
        %v641 = vpack.c.bf16 %v625, %v624
        %v642 = vld [vmem:[#allocation7] sm:$0xff]
        %v643 = vld [vmem:[#allocation7 + $0x8] sm:$0xf]
        %v644 = vld [vmem:[#allocation7 + $0xc] sm:$0xff]
        %v645 = vld [vmem:[#allocation7 + $0x14] sm:$0xf]
        %v646 = vld [vmem:[#allocation7 + $0x18] sm:$0xff]
        %v647 = vld [vmem:[#allocation7 + $0x20] sm:$0xf]
        %v648 = vld [vmem:[#allocation7 + $0x24] sm:$0xff]
        %v649 = vld [vmem:[#allocation7 + $0x2c] sm:$0xf]
        %v650 = vld [vmem:[#allocation7 + $0x30] sm:$0xff]
        %v651 = vld [vmem:[#allocation7 + $0x38] sm:$0xf]
        %v652 = vld [vmem:[#allocation7 + $0x3c] sm:$0xff]
        %v653 = vld [vmem:[#allocation7 + $0x44] sm:$0xf]
        %v654 = vld [vmem:[#allocation7 + $0x48] sm:$0xff]
        %v655 = vld [vmem:[#allocation7 + $0x50] sm:$0xf]
        %v656 = vld [vmem:[#allocation7 + $0x54] sm:$0xff]
        %v657 = vld [vmem:[#allocation7 + $0x5c] sm:$0xf]
        %v658 = vld [vmem:[#allocation7 + $0x60] sm:$0xff]
        %v659 = vld [vmem:[#allocation7 + $0x68] sm:$0xf]
        %v660 = vld [vmem:[#allocation7 + $0x6c] sm:$0xff]
        %v661 = vld [vmem:[#allocation7 + $0x74] sm:$0xf]
        %v662 = vld [vmem:[#allocation7 + $0x78] sm:$0xff]
        %v663 = vld [vmem:[#allocation7 + $0x80] sm:$0xf]
        %v664 = vld [vmem:[#allocation7 + $0x84] sm:$0xff]
        %v665 = vld [vmem:[#allocation7 + $0x8c] sm:$0xf]
        %v666 = vld [vmem:[#allocation7 + $0x90] sm:$0xff]
        %v667 = vld [vmem:[#allocation7 + $0x98] sm:$0xf]
        %v668 = vld [vmem:[#allocation7 + $0x9c] sm:$0xff]
        %v669 = vld [vmem:[#allocation7 + $0xa4] sm:$0xf]
        %v670 = vld [vmem:[#allocation7 + $0xa8] sm:$0xff]
        %v671 = vld [vmem:[#allocation7 + $0xb0] sm:$0xf]
        %v672 = vld [vmem:[#allocation7 + $0xb4] sm:$0xff]
        %v673 = vld [vmem:[#allocation7 + $0xbc] sm:$0xf]
        %v674 = vld [vmem:[#allocation7 + $0xc0] sm:$0xff]
        %v675 = vld [vmem:[#allocation7 + $0xc8] sm:$0xf]
        %v676 = vld [vmem:[#allocation7 + $0xcc] sm:$0xff]
        %v677 = vld [vmem:[#allocation7 + $0xd4] sm:$0xf]
        %v678 = vld [vmem:[#allocation7 + $0xd8] sm:$0xff]
        %v679 = vld [vmem:[#allocation7 + $0xe0] sm:$0xf]
        %v680 = vld [vmem:[#allocation7 + $0xe4] sm:$0xff]
        %v681 = vld [vmem:[#allocation7 + $0xec] sm:$0xf]
        %v682 = vld [vmem:[#allocation7 + $0xf0] sm:$0xff]
        %v683 = vld [vmem:[#allocation7 + $0xf8] sm:$0xf]
        %v684 = vld [vmem:[#allocation7 + $0xfc] sm:$0xff]
        %v685 = vld [vmem:[#allocation7 + $0x104] sm:$0xf]
        %v686 = vld [vmem:[#allocation7 + $0x108] sm:$0xff]
        %v687 = vld [vmem:[#allocation7 + $0x110] sm:$0xf]
        %v688 = vld [vmem:[#allocation7 + $0x114] sm:$0xff]
        %v689 = vld [vmem:[#allocation7 + $0x11c] sm:$0xf]
        %v690 = vld [vmem:[#allocation7 + $0x120] sm:$0xff]
        %v691 = vld [vmem:[#allocation7 + $0x128] sm:$0xf]
        %v692 = vld [vmem:[#allocation7 + $0x12c] sm:$0xff]
        %v693 = vld [vmem:[#allocation7 + $0x134] sm:$0xf]
        %v694 = vld [vmem:[#allocation7 + $0x138] sm:$0xff]
        %v695 = vld [vmem:[#allocation7 + $0x140] sm:$0xf]
        %v696 = vld [vmem:[#allocation7 + $0x144] sm:$0xff]
        %v697 = vld [vmem:[#allocation7 + $0x14c] sm:$0xf]
        %v698 = vld [vmem:[#allocation7 + $0x150] sm:$0xff]
        %v699 = vld [vmem:[#allocation7 + $0x158] sm:$0xf]
        %v700 = vld [vmem:[#allocation7 + $0x15c] sm:$0xff]
        %v701 = vld [vmem:[#allocation7 + $0x164] sm:$0xf]
        %v702 = vld [vmem:[#allocation7 + $0x168] sm:$0xff]
        %v703 = vld [vmem:[#allocation7 + $0x170] sm:$0xf]
        %v704 = vld [vmem:[#allocation7 + $0x174] sm:$0xff]
        %v705 = vld [vmem:[#allocation7 + $0x17c] sm:$0xf]
        %v770 = vunpack.c.l.b16 %v642
        %v771 = vunpack.c.h.b16 %v642
        %v772 = vunpack.c.l.b16 %v643
        %v773 = vunpack.c.l.b16 %v644
        %v774 = vunpack.c.h.b16 %v644
        %v775 = vunpack.c.l.b16 %v645
        %v776 = vunpack.c.l.b16 %v646
        %v777 = vunpack.c.h.b16 %v646
        %v778 = vunpack.c.l.b16 %v647
        %v779 = vunpack.c.l.b16 %v648
        %v780 = vunpack.c.h.b16 %v648
        %v781 = vunpack.c.l.b16 %v649
        %v782 = vunpack.c.l.b16 %v650
        %v783 = vunpack.c.h.b16 %v650
        %v784 = vunpack.c.l.b16 %v651
        %v785 = vunpack.c.l.b16 %v652
        %v786 = vunpack.c.h.b16 %v652
        %v787 = vunpack.c.l.b16 %v653
        %v788 = vunpack.c.l.b16 %v654
        %v789 = vunpack.c.h.b16 %v654
        %v790 = vunpack.c.l.b16 %v655
        %v791 = vunpack.c.l.b16 %v656
        %v792 = vunpack.c.h.b16 %v656
        %v793 = vunpack.c.l.b16 %v657
        %v794 = vunpack.c.l.b16 %v658
        %v795 = vunpack.c.h.b16 %v658
        %v796 = vunpack.c.l.b16 %v659
        %v797 = vunpack.c.l.b16 %v660
        %v798 = vunpack.c.h.b16 %v660
        %v799 = vunpack.c.l.b16 %v661
        %v800 = vunpack.c.l.b16 %v662
        %v801 = vunpack.c.h.b16 %v662
        %v802 = vunpack.c.l.b16 %v663
        %v803 = vunpack.c.l.b16 %v664
        %v804 = vunpack.c.h.b16 %v664
        %v805 = vunpack.c.l.b16 %v665
        %v806 = vunpack.c.l.b16 %v666
        %v807 = vunpack.c.h.b16 %v666
        %v808 = vunpack.c.l.b16 %v667
        %v809 = vunpack.c.l.b16 %v668
        %v810 = vunpack.c.h.b16 %v668
        %v811 = vunpack.c.l.b16 %v669
        %v812 = vunpack.c.l.b16 %v670
        %v813 = vunpack.c.h.b16 %v670
        %v814 = vunpack.c.l.b16 %v671
        %v815 = vunpack.c.l.b16 %v672
        %v816 = vunpack.c.h.b16 %v672
        %v817 = vunpack.c.l.b16 %v673
        %v818 = vunpack.c.l.b16 %v674
        %v819 = vunpack.c.h.b16 %v674
        %v820 = vunpack.c.l.b16 %v675
        %v821 = vunpack.c.l.b16 %v676
        %v822 = vunpack.c.h.b16 %v676
        %v823 = vunpack.c.l.b16 %v677
        %v824 = vunpack.c.l.b16 %v678
        %v825 = vunpack.c.h.b16 %v678
        %v826 = vunpack.c.l.b16 %v679
        %v827 = vunpack.c.l.b16 %v680
        %v828 = vunpack.c.h.b16 %v680
        %v829 = vunpack.c.l.b16 %v681
        %v830 = vunpack.c.l.b16 %v682
        %v831 = vunpack.c.h.b16 %v682
        %v832 = vunpack.c.l.b16 %v683
        %v833 = vunpack.c.l.b16 %v684
        %v834 = vunpack.c.h.b16 %v684
        %v835 = vunpack.c.l.b16 %v685
        %v836 = vunpack.c.l.b16 %v686
        %v837 = vunpack.c.h.b16 %v686
        %v838 = vunpack.c.l.b16 %v687
        %v839 = vunpack.c.l.b16 %v688
        %v840 = vunpack.c.h.b16 %v688
        %v841 = vunpack.c.l.b16 %v689
        %v842 = vunpack.c.l.b16 %v690
        %v843 = vunpack.c.h.b16 %v690
        %v844 = vunpack.c.l.b16 %v691
        %v845 = vunpack.c.l.b16 %v692
        %v846 = vunpack.c.h.b16 %v692
        %v847 = vunpack.c.l.b16 %v693
        %v848 = vunpack.c.l.b16 %v694
        %v849 = vunpack.c.h.b16 %v694
        %v850 = vunpack.c.l.b16 %v695
        %v851 = vunpack.c.l.b16 %v696
        %v852 = vunpack.c.h.b16 %v696
        %v853 = vunpack.c.l.b16 %v697
        %v854 = vunpack.c.l.b16 %v698
        %v855 = vunpack.c.h.b16 %v698
        %v856 = vunpack.c.l.b16 %v699
        %v857 = vunpack.c.l.b16 %v700
        %v858 = vunpack.c.h.b16 %v700
        %v859 = vunpack.c.l.b16 %v701
        %v860 = vunpack.c.l.b16 %v702
        %v861 = vunpack.c.h.b16 %v702
        %v862 = vunpack.c.l.b16 %v703
        %v863 = vunpack.c.l.b16 %v704
        %v864 = vunpack.c.h.b16 %v704
        %v865 = vunpack.c.l.b16 %v705
        %v866 = vpack.c.b16 %v773, %v770
        %v867 = vpack.c.b16 %v774, %v771
        %v868 = vpack.c.b16 %v775, %v772
        %v869 = vpack.c.b16 %v779, %v776
        %v870 = vpack.c.b16 %v780, %v777
        %v871 = vpack.c.b16 %v781, %v778
        %v872 = vpack.c.b16 %v785, %v782
        %v873 = vpack.c.b16 %v786, %v783
        %v874 = vpack.c.b16 %v787, %v784
        %v875 = vpack.c.b16 %v791, %v788
        %v876 = vpack.c.b16 %v792, %v789
        %v877 = vpack.c.b16 %v793, %v790
        %v878 = vpack.c.b16 %v797, %v794
        %v879 = vpack.c.b16 %v798, %v795
        %v880 = vpack.c.b16 %v799, %v796
        %v881 = vpack.c.b16 %v803, %v800
        %v882 = vpack.c.b16 %v804, %v801
        %v883 = vpack.c.b16 %v805, %v802
        %v884 = vpack.c.b16 %v809, %v806
        %v885 = vpack.c.b16 %v810, %v807
        %v886 = vpack.c.b16 %v811, %v808
        %v887 = vpack.c.b16 %v815, %v812
        %v888 = vpack.c.b16 %v816, %v813
        %v889 = vpack.c.b16 %v817, %v814
        %v890 = vpack.c.b16 %v821, %v818
        %v891 = vpack.c.b16 %v822, %v819
        %v892 = vpack.c.b16 %v823, %v820
        %v893 = vpack.c.b16 %v827, %v824
        %v894 = vpack.c.b16 %v828, %v825
        %v895 = vpack.c.b16 %v829, %v826
        %v896 = vpack.c.b16 %v833, %v830
        %v897 = vpack.c.b16 %v834, %v831
        %v898 = vpack.c.b16 %v835, %v832
        %v899 = vpack.c.b16 %v839, %v836
        %v900 = vpack.c.b16 %v840, %v837
        %v901 = vpack.c.b16 %v841, %v838
        %v902 = vpack.c.b16 %v845, %v842
        %v903 = vpack.c.b16 %v846, %v843
        %v904 = vpack.c.b16 %v847, %v844
        %v905 = vpack.c.b16 %v851, %v848
        %v906 = vpack.c.b16 %v852, %v849
        %v907 = vpack.c.b16 %v853, %v850
        %v908 = vpack.c.b16 %v857, %v854
        %v909 = vpack.c.b16 %v858, %v855
        %v910 = vpack.c.b16 %v859, %v856
        %v911 = vpack.c.b16 %v863, %v860
        %v912 = vpack.c.b16 %v864, %v861
        %v913 = vpack.c.b16 %v865, %v862
        %962 = vmatprep.subr.bf16.mxu0 %v867
        %963 = vmatpush1.bf16.msra.mxu0 %v866
        %964 = vmatprep.subr.bf16.mxu0 %v870
        %965 = vmatpush1.bf16.msra.mxu0 %v869
        %966 = vmatprep.subr.bf16.mxu0 %v873
        %967 = vmatpush1.bf16.msra.mxu0 %v872
        %968 = vmatprep.subr.bf16.mxu0 %v876
        %969 = vmatpush1.bf16.msra.mxu0 %v875
        %970 = vmatprep.subr.bf16.mxu0 %v879
        %971 = vmatpush1.bf16.msra.mxu0 %v878
        %972 = vmatprep.subr.bf16.mxu0 %v882
        %973 = vmatpush1.bf16.msra.mxu0 %v881
        %974 = vmatprep.subr.bf16.mxu0 %v885
        %975 = vmatpush1.bf16.msra.mxu0 %v884
        %976 = vmatprep.subr.bf16.mxu0 %v888
        %977 = vmatpush1.bf16.msra.mxu0 %v887
        %978 = vmatprep.subr.bf16.mxu0 %v891
        %979 = vmatpush1.bf16.msra.mxu0 %v890
        %980 = vmatprep.subr.bf16.mxu0 %v894
        %981 = vmatpush1.bf16.msra.mxu0 %v893
        %982 = vmatprep.subr.bf16.mxu0 %v897
        %983 = vmatpush1.bf16.msra.mxu0 %v896
        %984 = vmatprep.subr.bf16.mxu0 %v900
        %985 = vmatpush1.bf16.msra.mxu0 %v899
        %986 = vmatprep.subr.bf16.mxu0 %v903
        %987 = vmatpush1.bf16.msra.mxu0 %v902
        %988 = vmatprep.subr.bf16.mxu0 %v906
        %989 = vmatpush1.bf16.msra.mxu0 %v905
        %990 = vmatprep.subr.bf16.mxu0 %v909
        %991 = vmatpush1.bf16.msra.mxu0 %v908
        %992 = vmatprep.subr.bf16.mxu0 %v912
        %993 = vmatpush1.bf16.msra.mxu0 %v911
        %994 = vmatprep.mubr.bf16.mxu0 %v627
        %995 = vmatmul.mubr.bf16.gmra.mrb[0].mxu0 %v626
        %v996 = vpop.f32.mrb[0].mxu0
        %v997 = vadd.f32 0.0, %v996
        %v998 = vpop.f32.mrb[0].mxu0
        %v999 = vadd.f32 0.0, %v998
        %v1000 = vpop.f32.mrb[0].mxu0
        %v1001 = vadd.f32 0.0, %v1000
        %v1002 = vpop.f32.mrb[0].mxu0
        %v1003 = vadd.f32 0.0, %v1002
        %1004 = vmatprep.mubr.bf16.mxu0 %v629
        %1005 = vmatmul.mubr.bf16.gmra.mrb[0].mxu0 %v628
        %v1006 = vpop.f32.mrb[0].mxu0
        %v1007 = vadd.f32 0.0, %v1006
        %v1008 = vpop.f32.mrb[0].mxu0
        %v1009 = vadd.f32 0.0, %v1008
        %v1010 = vpop.f32.mrb[0].mxu0
        %v1011 = vadd.f32 0.0, %v1010
        %v1012 = vpop.f32.mrb[0].mxu0
        %v1013 = vadd.f32 0.0, %v1012
        %1014 = vmatprep.mubr.bf16.mxu0 %v631
        %1015 = vmatmul.mubr.bf16.gmra.mrb[0].mxu0 %v630
        %v1016 = vpop.f32.mrb[0].mxu0
        %v1017 = vadd.f32 0.0, %v1016
        %v1018 = vpop.f32.mrb[0].mxu0
        %v1019 = vadd.f32 0.0, %v1018
        %v1020 = vpop.f32.mrb[0].mxu0
        %v1021 = vadd.f32 0.0, %v1020
        %v1022 = vpop.f32.mrb[0].mxu0
        %v1023 = vadd.f32 0.0, %v1022
        %1024 = vmatprep.mubr.bf16.mxu0 %v633
        %1025 = vmatmul.mubr.bf16.gmra.mrb[0].mxu0 %v632
        %v1026 = vpop.f32.mrb[0].mxu0
        %v1027 = vadd.f32 0.0, %v1026
        %v1028 = vpop.f32.mrb[0].mxu0
        %v1029 = vadd.f32 0.0, %v1028
        %v1030 = vpop.f32.mrb[0].mxu0
        %v1031 = vadd.f32 0.0, %v1030
        %v1032 = vpop.f32.mrb[0].mxu0
        %v1033 = vadd.f32 0.0, %v1032
        %1034 = vmatprep.mubr.bf16.mxu0 %v635
        %1035 = vmatmul.mubr.bf16.gmra.mrb[0].mxu0 %v634
        %v1036 = vpop.f32.mrb[0].mxu0
        %v1037 = vadd.f32 0.0, %v1036
        %v1038 = vpop.f32.mrb[0].mxu0
        %v1039 = vadd.f32 0.0, %v1038
        %v1040 = vpop.f32.mrb[0].mxu0
        %v1041 = vadd.f32 0.0, %v1040
        %v1042 = vpop.f32.mrb[0].mxu0
        %v1043 = vadd.f32 0.0, %v1042
        %1044 = vmatprep.mubr.bf16.mxu0 %v637
        %1045 = vmatmul.mubr.bf16.gmra.mrb[0].mxu0 %v636
        %v1046 = vpop.f32.mrb[0].mxu0
        %v1047 = vadd.f32 0.0, %v1046
        %v1048 = vpop.f32.mrb[0].mxu0
        %v1049 = vadd.f32 0.0, %v1048
        %v1050 = vpop.f32.mrb[0].mxu0
        %v1051 = vadd.f32 0.0, %v1050
        %v1052 = vpop.f32.mrb[0].mxu0
        %v1053 = vadd.f32 0.0, %v1052
        %1054 = vmatprep.mubr.bf16.mxu0 %v639
        %1055 = vmatmul.mubr.bf16.gmra.mrb[0].mxu0 %v638
        %v1056 = vpop.f32.mrb[0].mxu0
        %v1057 = vadd.f32 0.0, %v1056
        %v1058 = vpop.f32.mrb[0].mxu0
        %v1059 = vadd.f32 0.0, %v1058
        %v1060 = vpop.f32.mrb[0].mxu0
        %v1061 = vadd.f32 0.0, %v1060
        %v1062 = vpop.f32.mrb[0].mxu0
        %v1063 = vadd.f32 0.0, %v1062
        %1064 = vmatprep.mubr.bf16.mxu0 %v641
        %1065 = vmatmul.mubr.bf16.gmra.mrb[0].mxu0 %v640
        %v1066 = vpop.f32.mrb[0].mxu0
        %v1067 = vadd.f32 0.0, %v1066
        %v1068 = vpop.f32.mrb[0].mxu0
        %v1069 = vadd.f32 0.0, %v1068
        %v1070 = vpop.f32.mrb[0].mxu0
        %v1071 = vadd.f32 0.0, %v1070
        %v1072 = vpop.f32.mrb[0].mxu0
        %v1073 = vadd.f32 0.0, %v1072
        %1074 = vdwg.mxu0
        %1075 = vmatprep.subr.bf16.mxu0 0
        %1076 = vmatpush1.bf16.msra.mxu0 %v868
        %1077 = vmatprep.subr.bf16.mxu0 0
        %1078 = vmatpush1.bf16.msra.mxu0 %v871
        %1079 = vmatprep.subr.bf16.mxu0 0
        %1080 = vmatpush1.bf16.msra.mxu0 %v874
        %1081 = vmatprep.subr.bf16.mxu0 0
        %1082 = vmatpush1.bf16.msra.mxu0 %v877
        %1083 = vmatprep.subr.bf16.mxu0 0
        %1084 = vmatpush1.bf16.msra.mxu0 %v880
        %1085 = vmatprep.subr.bf16.mxu0 0
        %1086 = vmatpush1.bf16.msra.mxu0 %v883
        %1087 = vmatprep.subr.bf16.mxu0 0
        %1088 = vmatpush1.bf16.msra.mxu0 %v886
        %1089 = vmatprep.subr.bf16.mxu0 0
        %1090 = vmatpush1.bf16.msra.mxu0 %v889
        %1091 = vmatprep.subr.bf16.mxu0 0
        %1092 = vmatpush1.bf16.msra.mxu0 %v892
        %1093 = vmatprep.subr.bf16.mxu0 0
        %1094 = vmatpush1.bf16.msra.mxu0 %v895
        %1095 = vmatprep.subr.bf16.mxu0 0
        %1096 = vmatpush1.bf16.msra.mxu0 %v898
        %1097 = vmatprep.subr.bf16.mxu0 0
        %1098 = vmatpush1.bf16.msra.mxu0 %v901
        %1099 = vmatprep.subr.bf16.mxu0 0
        %1100 = vmatpush1.bf16.msra.mxu0 %v904
        %1101 = vmatprep.subr.bf16.mxu0 0
        %1102 = vmatpush1.bf16.msra.mxu0 %v907
        %1103 = vmatprep.subr.bf16.mxu0 0
        %1104 = vmatpush1.bf16.msra.mxu0 %v910
        %1105 = vmatprep.subr.bf16.mxu0 0
        %1106 = vmatpush1.bf16.msra.mxu0 %v913
        %1107 = vmatprep.mubr.bf16.mxu0 %v627
        %1108 = vmatmul.mubr.bf16.gmra.mrb[0].mxu0 %v626
        %v1109 = vpop.f32.mrb[0].mxu0
        %v1110 = vadd.f32 0.0, %v1109
        %v1111 = vpop.f32.mrb[0].mxu0
        %v1112 = vpop.f32.mrb[0].mxu0
        %v1113 = vadd.f32 0.0, %v1112
        %v1114 = vpop.f32.mrb[0].mxu0
        %1115 = vmatprep.mubr.bf16.mxu0 %v629
        %1116 = vmatmul.mubr.bf16.gmra.mrb[0].mxu0 %v628
        %v1117 = vpop.f32.mrb[0].mxu0
        %v1118 = vadd.f32 0.0, %v1117
        %v1119 = vpop.f32.mrb[0].mxu0
        %v1120 = vpop.f32.mrb[0].mxu0
        %v1121 = vadd.f32 0.0, %v1120
        %v1122 = vpop.f32.mrb[0].mxu0
        %1123 = vmatprep.mubr.bf16.mxu0 %v631
        %1124 = vmatmul.mubr.bf16.gmra.mrb[0].mxu0 %v630
        %v1125 = vpop.f32.mrb[0].mxu0
        %v1126 = vadd.f32 0.0, %v1125
        %v1127 = vpop.f32.mrb[0].mxu0
        %v1128 = vpop.f32.mrb[0].mxu0
        %v1129 = vadd.f32 0.0, %v1128
        %v1130 = vpop.f32.mrb[0].mxu0
        %1131 = vmatprep.mubr.bf16.mxu0 %v633
        %1132 = vmatmul.mubr.bf16.gmra.mrb[0].mxu0 %v632
        %v1133 = vpop.f32.mrb[0].mxu0
        %v1134 = vadd.f32 0.0, %v1133
        %v1135 = vpop.f32.mrb[0].mxu0
        %v1136 = vpop.f32.mrb[0].mxu0
        %v1137 = vadd.f32 0.0, %v1136
        %v1138 = vpop.f32.mrb[0].mxu0
        %1139 = vmatprep.mubr.bf16.mxu0 %v635
        %1140 = vmatmul.mubr.bf16.gmra.mrb[0].mxu0 %v634
        %v1141 = vpop.f32.mrb[0].mxu0
        %v1142 = vadd.f32 0.0, %v1141
        %v1143 = vpop.f32.mrb[0].mxu0
        %v1144 = vpop.f32.mrb[0].mxu0
        %v1145 = vadd.f32 0.0, %v1144
        %v1146 = vpop.f32.mrb[0].mxu0
        %1147 = vmatprep.mubr.bf16.mxu0 %v637
        %1148 = vmatmul.mubr.bf16.gmra.mrb[0].mxu0 %v636
        %v1149 = vpop.f32.mrb[0].mxu0
        %v1150 = vadd.f32 0.0, %v1149
        %v1151 = vpop.f32.mrb[0].mxu0
        %v1152 = vpop.f32.mrb[0].mxu0
        %v1153 = vadd.f32 0.0, %v1152
        %v1154 = vpop.f32.mrb[0].mxu0
        %1155 = vmatprep.mubr.bf16.mxu0 %v639
        %1156 = vmatmul.mubr.bf16.gmra.mrb[0].mxu0 %v638
        %v1157 = vpop.f32.mrb[0].mxu0
        %v1158 = vadd.f32 0.0, %v1157
        %v1159 = vpop.f32.mrb[0].mxu0
        %v1160 = vpop.f32.mrb[0].mxu0
        %v1161 = vadd.f32 0.0, %v1160
        %v1162 = vpop.f32.mrb[0].mxu0
        %1163 = vmatprep.mubr.bf16.mxu0 %v641
        %1164 = vmatmul.mubr.bf16.gmra.mrb[0].mxu0 %v640
        %v1165 = vpop.f32.mrb[0].mxu0
        %v1166 = vadd.f32 0.0, %v1165
        %v1167 = vpop.f32.mrb[0].mxu0
        %v1168 = vpop.f32.mrb[0].mxu0
        %v1169 = vadd.f32 0.0, %v1168
        %v1170 = vpop.f32.mrb[0].mxu0
        %1171 = vdwg.mxu0
        %v1172 = vpack.c.bf16 %v1001, %v997
        %v1173 = vpack.c.bf16 %v1011, %v1007
        %v1174 = vpack.c.bf16 %v1021, %v1017
        %v1175 = vpack.c.bf16 %v1031, %v1027
        %v1176 = vpack.c.bf16 %v1041, %v1037
        %v1177 = vpack.c.bf16 %v1051, %v1047
        %v1178 = vpack.c.bf16 %v1061, %v1057
        %v1179 = vpack.c.bf16 %v1071, %v1067
        %v1188 = vunpack.c.l.b16 %v1172
        %v1189 = vunpack.c.h.b16 %v1172
        %v1190 = vunpack.c.l.b16 %v1173
        %v1191 = vunpack.c.h.b16 %v1173
        %v1192 = vunpack.c.l.b16 %v1174
        %v1193 = vunpack.c.h.b16 %v1174
        %v1194 = vunpack.c.l.b16 %v1175
        %v1195 = vunpack.c.h.b16 %v1175
        %v1196 = vunpack.c.l.b16 %v1176
        %v1197 = vunpack.c.h.b16 %v1176
        %v1198 = vunpack.c.l.b16 %v1177
        %v1199 = vunpack.c.h.b16 %v1177
        %v1200 = vunpack.c.l.b16 %v1178
        %v1201 = vunpack.c.h.b16 %v1178
        %v1202 = vunpack.c.l.b16 %v1179
        %v1203 = vunpack.c.h.b16 %v1179
        %v1204 = vpack.c.b16 %v1188, %v1188
        %v1205 = vpack.c.b16 %v1189, %v1189
        %v1206 = vpack.c.b16 %v1190, %v1190
        %v1207 = vpack.c.b16 %v1191, %v1191
        %v1208 = vpack.c.b16 %v1192, %v1192
        %v1209 = vpack.c.b16 %v1193, %v1193
        %v1210 = vpack.c.b16 %v1194, %v1194
        %v1211 = vpack.c.b16 %v1195, %v1195
        %v1212 = vpack.c.b16 %v1196, %v1196
        %v1213 = vpack.c.b16 %v1197, %v1197
        %v1214 = vpack.c.b16 %v1198, %v1198
        %v1215 = vpack.c.b16 %v1199, %v1199
        %v1216 = vpack.c.b16 %v1200, %v1200
        %v1217 = vpack.c.b16 %v1201, %v1201
        %v1218 = vpack.c.b16 %v1202, %v1202
        %v1219 = vpack.c.b16 %v1203, %v1203
        %1236 = vst [vmem:[%s327] sm:$0xf] %v1204
        %1237 = vst [vmem:[%s327 + $0x4] sm:$0xf] %v1205
        %1238 = vst [vmem:[%s327 + $0x8] sm:$0xf] %v1206
        %1239 = vst [vmem:[%s327 + $0xc] sm:$0xf] %v1207
        %1240 = vst [vmem:[%s327 + $0x10] sm:$0xf] %v1208
        %1241 = vst [vmem:[%s327 + $0x14] sm:$0xf] %v1209
        %1242 = vst [vmem:[%s327 + $0x18] sm:$0xf] %v1210
        %1243 = vst [vmem:[%s327 + $0x1c] sm:$0xf] %v1211
        %1244 = vst [vmem:[%s327 + $0x20] sm:$0xf] %v1212
        %1245 = vst [vmem:[%s327 + $0x24] sm:$0xf] %v1213
        %1246 = vst [vmem:[%s327 + $0x28] sm:$0xf] %v1214
        %1247 = vst [vmem:[%s327 + $0x2c] sm:$0xf] %v1215
        %1248 = vst [vmem:[%s327 + $0x30] sm:$0xf] %v1216
        %1249 = vst [vmem:[%s327 + $0x34] sm:$0xf] %v1217
        %1250 = vst [vmem:[%s327 + $0x38] sm:$0xf] %v1218
        %1251 = vst [vmem:[%s327 + $0x3c] sm:$0xf] %v1219
        %v1252 = vpack.c.bf16 %v1003, %v999
        %v1253 = vpack.c.bf16 %v1113, %v1110
        %v1254 = vpack.c.bf16 %v1013, %v1009
        %v1255 = vpack.c.bf16 %v1121, %v1118
        %v1256 = vpack.c.bf16 %v1023, %v1019
        %v1257 = vpack.c.bf16 %v1129, %v1126
        %v1258 = vpack.c.bf16 %v1033, %v1029
        %v1259 = vpack.c.bf16 %v1137, %v1134
        %v1260 = vpack.c.bf16 %v1043, %v1039
        %v1261 = vpack.c.bf16 %v1145, %v1142
        %v1262 = vpack.c.bf16 %v1053, %v1049
        %v1263 = vpack.c.bf16 %v1153, %v1150
        %v1264 = vpack.c.bf16 %v1063, %v1059
        %v1265 = vpack.c.bf16 %v1161, %v1158
        %v1266 = vpack.c.bf16 %v1073, %v1069
        %v1267 = vpack.c.bf16 %v1169, %v1166
        %v1284 = vunpack.c.l.b16 %v1252
        %v1285 = vunpack.c.l.b16 %v1253
        %v1286 = vunpack.c.h.b16 %v1252
        %v1287 = vunpack.c.h.b16 %v1253
        %v1288 = vunpack.c.l.b16 %v1254
        %v1289 = vunpack.c.l.b16 %v1255
        %v1290 = vunpack.c.h.b16 %v1254
        %v1291 = vunpack.c.h.b16 %v1255
        %v1292 = vunpack.c.l.b16 %v1256
        %v1293 = vunpack.c.l.b16 %v1257
        %v1294 = vunpack.c.h.b16 %v1256
        %v1295 = vunpack.c.h.b16 %v1257
        %v1296 = vunpack.c.l.b16 %v1258
        %v1297 = vunpack.c.l.b16 %v1259
        %v1298 = vunpack.c.h.b16 %v1258
        %v1299 = vunpack.c.h.b16 %v1259
        %v1300 = vunpack.c.l.b16 %v1260
        %v1301 = vunpack.c.l.b16 %v1261
        %v1302 = vunpack.c.h.b16 %v1260
        %v1303 = vunpack.c.h.b16 %v1261
        %v1304 = vunpack.c.l.b16 %v1262
        %v1305 = vunpack.c.l.b16 %v1263
        %v1306 = vunpack.c.h.b16 %v1262
        %v1307 = vunpack.c.h.b16 %v1263
        %v1308 = vunpack.c.l.b16 %v1264
        %v1309 = vunpack.c.l.b16 %v1265
        %v1310 = vunpack.c.h.b16 %v1264
        %v1311 = vunpack.c.h.b16 %v1265
        %v1312 = vunpack.c.l.b16 %v1266
        %v1313 = vunpack.c.l.b16 %v1267
        %v1314 = vunpack.c.h.b16 %v1266
        %v1315 = vunpack.c.h.b16 %v1267
        %v1316 = vpack.c.b16 %v1285, %v1284
        %v1317 = vpack.c.b16 %v1287, %v1286
        %v1318 = vpack.c.b16 %v1289, %v1288
        %v1319 = vpack.c.b16 %v1291, %v1290
        %v1320 = vpack.c.b16 %v1293, %v1292
        %v1321 = vpack.c.b16 %v1295, %v1294
        %v1322 = vpack.c.b16 %v1297, %v1296
        %v1323 = vpack.c.b16 %v1299, %v1298
        %v1324 = vpack.c.b16 %v1301, %v1300
        %v1325 = vpack.c.b16 %v1303, %v1302
        %v1326 = vpack.c.b16 %v1305, %v1304
        %v1327 = vpack.c.b16 %v1307, %v1306
        %v1328 = vpack.c.b16 %v1309, %v1308
        %v1329 = vpack.c.b16 %v1311, %v1310
        %v1330 = vpack.c.b16 %v1313, %v1312
        %v1331 = vpack.c.b16 %v1315, %v1314
        %1348 = vst [vmem:[%s334] sm:$0xff] %v1316
        %1349 = vst [vmem:[%s334 + $0x8] sm:$0xff] %v1317
        %1350 = vst [vmem:[%s334 + $0x10] sm:$0xff] %v1318
        %1351 = vst [vmem:[%s334 + $0x18] sm:$0xff] %v1319
        %1352 = vst [vmem:[%s334 + $0x20] sm:$0xff] %v1320
        %1353 = vst [vmem:[%s334 + $0x28] sm:$0xff] %v1321
        %1354 = vst [vmem:[%s334 + $0x30] sm:$0xff] %v1322
        %1355 = vst [vmem:[%s334 + $0x38] sm:$0xff] %v1323
        %1356 = vst [vmem:[%s334 + $0x40] sm:$0xff] %v1324
        %1357 = vst [vmem:[%s334 + $0x48] sm:$0xff] %v1325
        %1358 = vst [vmem:[%s334 + $0x50] sm:$0xff] %v1326
        %1359 = vst [vmem:[%s334 + $0x58] sm:$0xff] %v1327
        %1360 = vst [vmem:[%s334 + $0x60] sm:$0xff] %v1328
        %1361 = vst [vmem:[%s334 + $0x68] sm:$0xff] %v1329
        %1362 = vst [vmem:[%s334 + $0x70] sm:$0xff] %v1330
        %1363 = vst [vmem:[%s334 + $0x78] sm:$0xff] %v1331
        %s1364 = sand.u32 %s153, 1
        %s1365 = scalar_lea.sflag [#allocation4], %s1364
        %s1366 = sand.u32 %s153, 1
        %s1367 = smul.addr %s1366, 64
        %s1368 = scalar_lea.vmem [#allocation8], %s1367
        %s1369 = sand.u32 %s179, 1
        %s1370 = scalar_lea.sflag [#allocation10], %s1369
        %s1371 = sand.u32 %s179, 1
        %s1372 = smul.addr %s1371, 128
        %s1373 = scalar_lea.vmem [#allocation9], %s1372
        // Predicated region
        $region53: #{tpu_custom_call.1} parent=39 // pred_check
          %p1374 = pneg %p163
        $region54: #{tpu_custom_call.1} parent=39 // pred_check_branch
          %1376 = sbr.rel (%p1374) target = $region56
        $region55: #{tpu_custom_call.1} parent=39 // pred_region
          %s1377 = smul.u32 16, %s30
          %s1379 = ssub.s32 1024, 1024
          %1380 = vsyncadd %s1365, %s1379
          %s1381 = smul.addr %s1377, 64
          %s1382 = scalar_lea.hbm %s5, %s1381
          %s1383 = sshll.u32 %s1368, 4
          %s1384 = int_to_ptr.vmem [resolvable:$true] %s1383
          %1389 = dma.vmem_to_hbm [thread:$0]  %s1384, 1024, %s1382, %s1365, 64, 64, 4
        $region56: #{tpu_custom_call.1} parent=39 // pred_fallthru
          _
        // Predicated region
        $region57: #{tpu_custom_call.1} parent=39 // pred_check
          %p1390 = pneg %p189
        $region58: #{tpu_custom_call.1} parent=39 // pred_check_branch
          %1392 = sbr.rel (%p1390) target = $region60
        $region59: #{tpu_custom_call.1} parent=39 // pred_region
          %s1393 = smul.u32 16, %s30
          %s1395 = ssub.s32 2048, 2048
          %1396 = vsyncadd %s1370, %s1395
          %s1397 = smul.addr %s1393, 2
          %s1398 = smul.addr %s1397, 64
          %s1399 = scalar_lea.hbm %s6, %s1398
          %s1400 = sshll.u32 %s1373, 4
          %s1401 = int_to_ptr.vmem [resolvable:$true] %s1400
          %1406 = dma.vmem_to_hbm [thread:$0]  %s1401, 2048, %s1399, %s1370, 128, 128, 8
        $region60: #{tpu_custom_call.1} parent=39 // pred_fallthru
          _
      $region40: #{tpu_custom_call.1} parent=5 // pred_fallthru
        _
      %p1407 = scmp.le.s32.totalorder 2, %s25
      // Predicated region
      $region61: #{tpu_custom_call.1} parent=5 // pred_check
        %p1408 = pneg %p1407
      $region62: #{tpu_custom_call.1} parent=5 // pred_check_branch
        %1410 = sbr.rel (%p1408) target = $region64
      $region63: #{tpu_custom_call.1} parent=5 // pred_region
        %s1411 = ssub.s32 %s25, 2
        // Predicated region
        $region65: #{tpu_custom_call.1} parent=63 // pred_check
          %p1412 = pneg %p169
        $region66: #{tpu_custom_call.1} parent=63 // pred_check_branch
          %1414 = sbr.rel (%p1412) target = $region68
        $region67: #{tpu_custom_call.1} parent=63 // pred_region
          %s1415 = sand.u32 %s154, 1
          %s1416 = scalar_lea.sflag [#allocation4], %s1415
          %s1417 = sand.u32 %s154, 1
          %s1418 = smul.addr %s1417, 64
          %s1419 = scalar_lea.vmem [#allocation8], %s1418
          %1420 = dma.done %s1416, 1024
        $region68: #{tpu_custom_call.1} parent=63 // pred_fallthru
          _
        // Predicated region
        $region69: #{tpu_custom_call.1} parent=63 // pred_check
          %p1421 = pneg %p195
        $region70: #{tpu_custom_call.1} parent=63 // pred_check_branch
          %1423 = sbr.rel (%p1421) target = $region72
        $region71: #{tpu_custom_call.1} parent=63 // pred_region
          %s1424 = sand.u32 %s180, 1
          %s1425 = scalar_lea.sflag [#allocation10], %s1424
          %s1426 = sand.u32 %s180, 1
          %s1427 = smul.addr %s1426, 128
          %s1428 = scalar_lea.vmem [#allocation9], %s1427
          %1429 = dma.done %s1425, 2048
        $region72: #{tpu_custom_call.1} parent=63 // pred_fallthru
          _
      $region64: #{tpu_custom_call.1} parent=5 // pred_fallthru
        _
    $region6: #{tpu_custom_call.1} parent=1 // loop_footer
      %s29 = sadd.s32 1, %s25
    $region7: #{tpu_custom_call.1} parent=1 // loop_footer_branch
      %24 = sbr.rel target = $region3
    $region8: #{tpu_custom_call.1} parent=1 // loop_exit
      _
    %1430 = vsyncpa [#allocation3], 1
    %s1431 = scalar_lea.sflag [#allocation3], 1
    %1432 = vsyncpa %s1431, 1
    %1433 = vsyncpa [#allocation6], 1
    %s1434 = scalar_lea.sflag [#allocation6], 1
    %1435 = vsyncpa %s1434, 1
    %1436 = vsyncpa [#allocation4], 1
    %s1437 = scalar_lea.sflag [#allocation4], 1
    %1438 = vsyncpa %s1437, 1
    %1439 = vsyncpa [#allocation10], 1
    %s1440 = scalar_lea.sflag [#allocation10], 1
    %1441 = vsyncpa %s1440, 1

</llo_original>
